<compile_context>
chip_gen: v6e
topology: v6e:2x2x1
jax: 0.10.0
libtpu: 0.0.40
codegen_flags: <defaults>
</compile_context>

<pallas_src>
import functools

import numpy as np
import jax
import jax.numpy as jnp
from jax.experimental import pallas as pl
from jax.experimental.pallas import tpu as pltpu

# ----------------------------- configuration --------------------------------
DIM_IN = 4          # nparams (independent variables per sample)
DIM_PARENT = 4      # output dim of each root (parent) node
DIM_OUT = 4         # output dim of the target node
NUM_PARENTS = 2     # graph: two roots -> one target, scale-shift edges
BATCH = 1024        # samples: enough grid steps to amortize per-call overhead
TILE_B = 256        # batch tile (multiple of 256 / 128 for v6e / v5e MXU)
PAD = 128           # lane width: all feature dims zero-padded to this


# ------------------------------- kernel -------------------------------------
def mfnet_scale_shift_kernel(x_ref, w_ref, s_ref, o_ref, *, num_parents, pad):
    """One batch tile of the scale-shift MFNet forward, fully fused.

    x_ref : (TILE_B, PAD)            x with a ones column (bias) + zero padding
    w_ref : (PAD, (2P+1)*PAD)        [W_target | W_p0@R | .. | W_p{P-1}@R | We_0 | .. | We_{P-1}]
                                     (each bias folded into row DIM_IN of its block;
                                      R-replication pre-folded into parent blocks)
    s_ref : (PAD, PAD)               segment-sum 0/1 matrix S
    o_ref : (TILE_B, PAD)            target-node eval (true values in first DIM_OUT lanes)
    """
    x = x_ref[...]
    s = s_ref[...]

    # Target node f3(x): first 128-lane block of the fused weights.
    acc = jnp.dot(x, w_ref[:, :pad], preferred_element_type=jnp.float32)

    # Scale-shift edge contributions: einsum('ijk,ik->ij', rho, f_parent)
    # == ( sum_p rho_p * (f_p @ R) ) @ S ,  with (f_p @ R) = x @ (W_p @ R)
    # pre-folded on the host.  All slices are static and lane-aligned.
    z = None
    for p in range(num_parents):                       # static, unrolled
        f_tiled = jnp.dot(x, w_ref[:, (1 + p) * pad:(2 + p) * pad],
                          preferred_element_type=jnp.float32)
        rho = jnp.dot(x, w_ref[:, (1 + num_parents + p) * pad:
                                  (2 + num_parents + p) * pad],
                      preferred_element_type=jnp.float32)
        zp = rho * f_tiled                             # VPU elementwise
        z = zp if z is None else z + zp

    acc = acc + jnp.dot(z, s, preferred_element_type=jnp.float32)
    o_ref[...] = acc.astype(o_ref.dtype)


# ------------------------------- wrapper -------------------------------------
def _fold_linear(W, b, pad):
    """Embed (W, b) of a linear model into a (pad, pad) block; bias in row d_in."""
    d_in, d_out = W.shape
    blk = jnp.zeros((pad, pad), jnp.float32)
    blk = blk.at[:d_in, :d_out].set(W.astype(jnp.float32))
    blk = blk.at[d_in, :d_out].set(b.astype(jnp.float32))
    return blk


def _replicate_segment_matrices(d_out, d_parent, pad):
    """Constant 0/1 matrices implementing the per-sample einsum('ijk,ik->ij')."""
    R = np.zeros((pad, pad), np.float32)
    S = np.zeros((pad, pad), np.float32)
    for j in range(d_out):
        for k in range(d_parent):
            R[k, j * d_parent + k] = 1.0    # replicate:  (f @ R)[:, j*dp+k] == f[:, k]
            S[j * d_parent + k, j] = 1.0    # segment sum: (z @ S)[:, j] == sum_k z[:, j*dp+k]
    return jnp.asarray(R), jnp.asarray(S)


def mfnet_scale_shift_forward(x, node_params, edge_params, *,
                              tile_b=TILE_B, pad=PAD):
    """Evaluate the target node of the 2-root -> 1-target MFNet graph.

    node_params : [(W, b)] for parent nodes (parent order) + target node LAST
    edge_params : [(W, b)] for parent->target edges, same parent order
    """
    num_parents = len(edge_params)
    assert len(node_params) == num_parents + 1
    batch, dim_in = x.shape
    d_out = node_params[-1][0].shape[1]
    d_parents = [w.shape[1] for w, _ in node_params[:-1]]
    assert all(d == d_parents[0] for d in d_parents), \
        "shared R/S matrices require equal parent output dims"
    d_parent = d_parents[0]
    assert dim_in + 1 <= pad and d_out * d_parent <= pad and d_out <= pad

    # Bias folding: ones column appended to x, feature dim zero-padded to PAD.
    x_aug = jnp.zeros((batch, pad), jnp.float32)
    x_aug = x_aug.at[:, :dim_in].set(x.astype(jnp.float32))
    x_aug = x_aug.at[:, dim_in].set(1.0)

    R, S = _replicate_segment_matrices(d_out, d_parent, pad)

    # Fuse every node/edge linear model into a single lane-dense weight matrix.
    # Parent blocks are pre-multiplied by R so the kernel skips the per-parent
    # replicate matmul.
    blocks = ([_fold_linear(node_params[-1][0], node_params[-1][1], pad)]
              + [_fold_linear(w, b, pad) @ R for w, b in node_params[:-1]]
              + [_fold_linear(w, b, pad) for w, b in edge_params])
    w_all = jnp.concatenate(blocks, axis=1)                  # (pad, (2P+1)*pad)

    # Pad the batch to a tile multiple so no masked tail tile is ever needed.
    batch_pad = pl.cdiv(batch, tile_b) * tile_b
    if batch_pad != batch:
        x_aug = jnp.pad(x_aug, ((0, batch_pad - batch), (0, 0)))

    kernel = functools.partial(mfnet_scale_shift_kernel,
                               num_parents=num_parents, pad=pad)
    grid = (batch_pad // tile_b,)
    out = pl.pallas_call(
        kernel,
        out_shape=jax.ShapeDtypeStruct((batch_pad, pad), jnp.float32),
        grid=grid,
        in_specs=[
            pl.BlockSpec((tile_b, pad), lambda i: (i, 0)),               # x tile
            pl.BlockSpec((pad, (2 * num_parents + 1) * pad),
                         lambda i: (0, 0)),                              # fused weights
            pl.BlockSpec((pad, pad), lambda i: (0, 0)),                  # S
        ],
        out_specs=pl.BlockSpec((tile_b, pad), lambda i: (i, 0)),         # lane-dense
        compiler_params=pltpu.CompilerParams(
            dimension_semantics=("parallel",)),
    )(x_aug, w_all, S)

    # Lane-dense padded output -> true (batch, d_out) result (layout plumbing).
    return out[:batch, :d_out]


# ------------------------------ reference ------------------------------------
def reference(x, node_params, edge_params):
    """Pure-JAX mirror of MFNetTorch.eval_target_node_scale_shift_."""
    parent_evals = [x @ w + b for w, b in node_params[:-1]]
    wt, bt = node_params[-1]
    out = x @ wt + bt                                   # target node 'func'
    d_out = wt.shape[1]
    for (we, be), f_p in zip(edge_params, parent_evals):
        rho = (x @ we + be).reshape(x.shape[0], d_out, f_p.shape[1])
        out = out + jnp.einsum('ijk,ik->ij', rho, f_p)  # scale-shift edge
    return out


# -------------------------------- main ---------------------------------------
if __name__ == "__main__":
    key = jax.random.PRNGKey(0)
    keys = jax.random.split(key, 1 + 2 * (NUM_PARENTS + 1) + 2 * NUM_PARENTS)
    it = iter(keys)

    x = jax.random.normal(next(it), (BATCH, DIM_IN), dtype=jnp.float32)

    node_params = []
    for d in [DIM_PARENT] * NUM_PARENTS + [DIM_OUT]:      # parents, then target
        w = jax.random.normal(next(it), (DIM_IN, d), dtype=jnp.float32) * 0.1
        b = jax.random.normal(next(it), (d,), dtype=jnp.float32) * 0.1
        node_params.append((w, b))

    edge_params = []
    for _ in range(NUM_PARENTS):
        w = jax.random.normal(next(it), (DIM_IN, DIM_OUT * DIM_PARENT),
                              dtype=jnp.float32) * 0.1
        b = jax.random.normal(next(it), (DIM_OUT * DIM_PARENT,),
                              dtype=jnp.float32) * 0.1
        edge_params.append((w, b))

    out = mfnet_scale_shift_forward(x, node_params, edge_params)
    out = jax.block_until_ready(out)

    ref = reference(x, node_params, edge_params)
    assert out.shape == (BATCH, DIM_OUT)
    assert jnp.allclose(out, ref, atol=1e-4, rtol=1e-4), "mismatch vs reference"

    print("KERNEL_OK")
</pallas_src>

<mosaic_0001>
module attributes {stable_mosaic.version = 11 : i64} {
  func.func @mfnet_scale_shift_kernel(%arg0: i32, %arg1: memref<256x128xf32, #tpu.memory_space<vmem>>, %arg2: memref<128x640xf32, #tpu.memory_space<vmem>>, %arg3: memref<128x128xf32, #tpu.memory_space<vmem>>, %arg4: memref<256x128xf32, #tpu.memory_space<vmem>>) attributes {dimension_semantics = [#tpu.dimension_semantics<parallel>], iteration_bounds = array<i64: 4>, scalar_prefetch = 0 : i64, scratch_operands = 0 : i64, tpu.core_type = #tpu.core_type<tc>, window_params = [{transform_indices = @transform_0, window_bounds = array<i64: 256, 128>}, {pipeline_mode = #tpu.pipeline_mode<synchronous>, transform_indices = @transform_1, window_bounds = array<i64: 128, 640>}, {pipeline_mode = #tpu.pipeline_mode<synchronous>, transform_indices = @transform_2, window_bounds = array<i64: 128, 128>}, {transform_indices = @transform_3, window_bounds = array<i64: 256, 128>}]} {
    %c0 = arith.constant 0 : index
    %c0_0 = arith.constant 0 : index
    %0 = vector.load %arg1[%c0, %c0_0] : memref<256x128xf32, #tpu.memory_space<vmem>>, vector<256x128xf32>
    %c0_1 = arith.constant 0 : index
    %c0_2 = arith.constant 0 : index
    %1 = vector.load %arg3[%c0_1, %c0_2] : memref<128x128xf32, #tpu.memory_space<vmem>>, vector<128x128xf32>
    %c0_3 = arith.constant 0 : index
    %c0_4 = arith.constant 0 : index
    %2 = vector.load %arg2[%c0_3, %c0_4] : memref<128x640xf32, #tpu.memory_space<vmem>>, vector<128x128xf32>
    %cst = arith.constant dense<0.000000e+00> : vector<256x128xf32>
    %3 = tpu.matmul %0, %2, %cst {dimension_numbers = #tpu.dot_dimension_numbers<[1], [0], [0], [1], [0, 0, 1, 1], [], []>} : vector<256x128xf32>, vector<128x128xf32>, vector<256x128xf32> -> vector<256x128xf32>
    %c0_5 = arith.constant 0 : index
    %c128 = arith.constant 128 : index
    %4 = vector.load %arg2[%c0_5, %c128] : memref<128x640xf32, #tpu.memory_space<vmem>>, vector<128x128xf32>
    %cst_6 = arith.constant dense<0.000000e+00> : vector<256x128xf32>
    %5 = tpu.matmul %0, %4, %cst_6 {dimension_numbers = #tpu.dot_dimension_numbers<[1], [0], [0], [1], [0, 0, 1, 1], [], []>} : vector<256x128xf32>, vector<128x128xf32>, vector<256x128xf32> -> vector<256x128xf32>
    %c0_7 = arith.constant 0 : index
    %c384 = arith.constant 384 : index
    %6 = vector.load %arg2[%c0_7, %c384] : memref<128x640xf32, #tpu.memory_space<vmem>>, vector<128x128xf32>
    %cst_8 = arith.constant dense<0.000000e+00> : vector<256x128xf32>
    %7 = tpu.matmul %0, %6, %cst_8 {dimension_numbers = #tpu.dot_dimension_numbers<[1], [0], [0], [1], [0, 0, 1, 1], [], []>} : vector<256x128xf32>, vector<128x128xf32>, vector<256x128xf32> -> vector<256x128xf32>
    %8 = arith.mulf %7, %5 : vector<256x128xf32>
    %c0_9 = arith.constant 0 : index
    %c256 = arith.constant 256 : index
    %9 = vector.load %arg2[%c0_9, %c256] : memref<128x640xf32, #tpu.memory_space<vmem>>, vector<128x128xf32>
    %cst_10 = arith.constant dense<0.000000e+00> : vector<256x128xf32>
    %10 = tpu.matmul %0, %9, %cst_10 {dimension_numbers = #tpu.dot_dimension_numbers<[1], [0], [0], [1], [0, 0, 1, 1], [], []>} : vector<256x128xf32>, vector<128x128xf32>, vector<256x128xf32> -> vector<256x128xf32>
    %c0_11 = arith.constant 0 : index
    %c512 = arith.constant 512 : index
    %11 = vector.load %arg2[%c0_11, %c512] : memref<128x640xf32, #tpu.memory_space<vmem>>, vector<128x128xf32>
    %cst_12 = arith.constant dense<0.000000e+00> : vector<256x128xf32>
    %12 = tpu.matmul %0, %11, %cst_12 {dimension_numbers = #tpu.dot_dimension_numbers<[1], [0], [0], [1], [0, 0, 1, 1], [], []>} : vector<256x128xf32>, vector<128x128xf32>, vector<256x128xf32> -> vector<256x128xf32>
    %13 = arith.mulf %12, %10 : vector<256x128xf32>
    %14 = arith.addf %8, %13 : vector<256x128xf32>
    %cst_13 = arith.constant dense<0.000000e+00> : vector<256x128xf32>
    %15 = tpu.matmul %14, %1, %cst_13 {dimension_numbers = #tpu.dot_dimension_numbers<[1], [0], [0], [1], [0, 0, 1, 1], [], []>} : vector<256x128xf32>, vector<128x128xf32>, vector<256x128xf32> -> vector<256x128xf32>
    %16 = arith.addf %3, %15 : vector<256x128xf32>
    %c0_14 = arith.constant 0 : index
    %c0_15 = arith.constant 0 : index
    %17 = vector.load %arg4[%c0_14, %c0_15] : memref<256x128xf32, #tpu.memory_space<vmem>>, vector<256x128xf32>
    tpu.vector_store %arg4[%c0_14, %c0_15], %16 {strides = array<i32>} : memref<256x128xf32, #tpu.memory_space<vmem>>, vector<256x128xf32>,
    return
  }
  func.func @transform_0(%arg0: i32) -> (i32, i32) {
    %c0_i32 = arith.constant 0 : i32
    %c0_i32_0 = arith.constant 0 : i32
    return %arg0, %c0_i32 : i32, i32
  }
  func.func @transform_1(%arg0: i32) -> (i32, i32) {
    %c0_i32 = arith.constant 0 : i32
    %c0_i32_0 = arith.constant 0 : i32
    %c0_i32_1 = arith.constant 0 : i32
    return %c0_i32, %c0_i32_0 : i32, i32
  }
  func.func @transform_2(%arg0: i32) -> (i32, i32) {
    %c0_i32 = arith.constant 0 : i32
    %c0_i32_0 = arith.constant 0 : i32
    %c0_i32_1 = arith.constant 0 : i32
    return %c0_i32, %c0_i32_0 : i32, i32
  }
  func.func @transform_3(%arg0: i32) -> (i32, i32) {
    %c0_i32 = arith.constant 0 : i32
    %c0_i32_0 = arith.constant 0 : i32
    return %arg0, %c0_i32 : i32, i32
  }
}

</mosaic_0001>

<llo_original>
// kernel: tpu_custom_call.1
$region0: #{tpu_custom_call.1}
  #allocation0 [shape = 'u32[]', space=smem, size = 0x4, offset = 0x4, fixed_abs, tag = 'smem constant byte address 0x4 - core index']
  #allocation1 [shape = 'u32[144,128]{1,0:T(1,128)}', space=vmem, size = 0x12000, scoped, tag = 'internal scratch']
  %s0 = inlined_call_operand.hbm [shape: f32[1024,128], index: 0, kind: input, shape index: {}]
  %s1 = inlined_call_operand.hbm [shape: f32[128,640], index: 1, kind: input, shape index: {}]
  %s2 = inlined_call_operand.hbm [shape: f32[128,128], index: 2, kind: input, shape index: {}]
  %s3 = inlined_call_operand.hbm [shape: f32[1024,128], index: 3, kind: output, shape index: {}]
  %s4 = sld [smem:[#allocation0]]
  $region57: #{tpu_custom_call.1} parent=0
    _
  %s6 = ssub.s32 1, %s4
  %s7 = scalar_select 0, %s6, %s4
  $region1: #{tpu_custom_call.1} parent=0
    #allocation2 [shape = 'u8[262144]{0}', space=vmem, size = 0x40000, scoped, tag = 'input window, operand 0']
    #allocation3 [shape = 's32[2]{0}', space=sflag, size = 0x8, scoped, tag = 'scoped memory for tpu_custom_call.1']
    #allocation4 [shape = 's32[2]{0}', space=sflag, size = 0x8, scoped, tag = 'scoped memory for tpu_custom_call.1']
    #allocation5 [shape = 'u8[327680]{0}', space=vmem, size = 0x50000, scoped, tag = 'input window, operand 1, single buffered']
    #allocation6 [shape = 's32[1]{0}', space=sflag, size = 0x4, scoped, tag = 'scoped memory for tpu_custom_call.1']
    #allocation7 [shape = 'u8[65536]{0}', space=vmem, size = 0x10000, scoped, tag = 'input window, operand 2, single buffered']
    #allocation8 [shape = 'u8[262144]{0}', space=vmem, size = 0x40000, scoped, tag = 'output window, operand 0']
    %8 = vsyncpa [#allocation3], 0
    %s9 = scalar_lea.sflag [#allocation3], 1
    %10 = vsyncpa %s9, 0
    %11 = vsyncpa [#allocation6], 0
    %12 = vsyncpa [#allocation4], 0
    %s13 = scalar_lea.sflag [#allocation4], 1
    %14 = vsyncpa %s13, 0
    loop: start=0, step=1, limit=6
    $region2: #{tpu_custom_call.1} parent=1 // loop_pre_header
      _
    $region3: #{tpu_custom_call.1} parent=1 // loop_header
      %s16 = sphi 0, %s20
      %p17 = scmp.ge.s32.totalorder %s16, 6
      %s26 = sphi 0, %s28
      %s29 = sphi 0, %s26
      %s30 = sphi 0, %s29
      %s46 = sphi 0, %s30
      %s50 = sphi 0, %s50
      %s52 = sphi 0, %s50
      %s53 = sphi 0, %s52
      %s67 = sphi 0, %s53
      %s71 = sphi 0, %s71
      %s73 = sphi 0, %s71
      %s74 = sphi 0, %s73
      %s88 = sphi 0, %s74
      %s94 = sphi 0, %s96
      %s97 = sphi 0, %s94
      %s98 = sphi 0, %s97
      %s114 = sphi 0, %s98
    $region4: #{tpu_custom_call.1} parent=1 // loop_header_branch
      %19 = sbr.rel (%p17) target = $region8
    $region5: #{tpu_custom_call.1} parent=1 // loop_body
      %s21 = ssub.s32 %s16, 1
      %s22 = ssub.s32 %s16, 2
      %s23 = sadd.s32 %s16, 1
      %s24 = ssub.s32 %s16, %s23
      %p25 = scmp.eq.s32.totalorder %s24, 0
      %s27 = sadd.s32 %s26, 1
      %s28 = scalar_select %p25, %s26, %s27
      %p31 = pneg %p25
      %p32 = scmp.eq.s32.totalorder %s16, 3
      %p33 = por %p31, %p32
      %p34 = scmp.ne.s32.totalorder %s26, %s29
      %p35 = scmp.eq.s32.totalorder %s16, 0
      %p36 = por %p34, %p35
      %p37 = scmp.ne.s32.totalorder %s26, %s29
      %p38 = scmp.eq.s32.totalorder %s21, 3
      %p39 = por %p37, %p38
      %p40 = scmp.ne.s32.totalorder %s29, %s30
      %p41 = scmp.eq.s32.totalorder %s21, 0
      %p42 = por %p40, %p41
      %p43 = scmp.ne.s32.totalorder %s29, %s30
      %p44 = scmp.eq.s32.totalorder %s22, 3
      %p45 = por %p43, %p44
      %p47 = scmp.ne.s32.totalorder %s30, %s46
      %p48 = scmp.eq.s32.totalorder %s22, 0
      %p49 = por %p47, %p48
      %s51 = sadd.s32 %s50, 1
      %p54 = scmp.eq.s32.totalorder %s16, 3
      %p55 = scmp.ne.s32.totalorder %s50, %s52
      %p56 = scmp.eq.s32.totalorder %s16, 0
      %p57 = por %p55, %p56
      %p58 = scmp.ne.s32.totalorder %s50, %s52
      %p59 = scmp.eq.s32.totalorder %s21, 3
      %p60 = por %p58, %p59
      %p61 = scmp.ne.s32.totalorder %s52, %s53
      %p62 = scmp.eq.s32.totalorder %s21, 0
      %p63 = por %p61, %p62
      %p64 = scmp.ne.s32.totalorder %s52, %s53
      %p65 = scmp.eq.s32.totalorder %s22, 3
      %p66 = por %p64, %p65
      %p68 = scmp.ne.s32.totalorder %s53, %s67
      %p69 = scmp.eq.s32.totalorder %s22, 0
      %p70 = por %p68, %p69
      %s72 = sadd.s32 %s71, 1
      %p75 = scmp.eq.s32.totalorder %s16, 3
      %p76 = scmp.ne.s32.totalorder %s71, %s73
      %p77 = scmp.eq.s32.totalorder %s16, 0
      %p78 = por %p76, %p77
      %p79 = scmp.ne.s32.totalorder %s71, %s73
      %p80 = scmp.eq.s32.totalorder %s21, 3
      %p81 = por %p79, %p80
      %p82 = scmp.ne.s32.totalorder %s73, %s74
      %p83 = scmp.eq.s32.totalorder %s21, 0
      %p84 = por %p82, %p83
      %p85 = scmp.ne.s32.totalorder %s73, %s74
      %p86 = scmp.eq.s32.totalorder %s22, 3
      %p87 = por %p85, %p86
      %p89 = scmp.ne.s32.totalorder %s74, %s88
      %p90 = scmp.eq.s32.totalorder %s22, 0
      %p91 = por %p89, %p90
      %s92 = ssub.s32 %s16, %s23
      %p93 = scmp.eq.s32.totalorder %s92, 0
      %s95 = sadd.s32 %s94, 1
      %s96 = scalar_select %p93, %s94, %s95
      %p99 = pneg %p93
      %p100 = scmp.eq.s32.totalorder %s16, 3
      %p101 = por %p99, %p100
      %p102 = scmp.ne.s32.totalorder %s94, %s97
      %p103 = scmp.eq.s32.totalorder %s16, 0
      %p104 = por %p102, %p103
      %p105 = scmp.ne.s32.totalorder %s94, %s97
      %p106 = scmp.eq.s32.totalorder %s21, 3
      %p107 = por %p105, %p106
      %p108 = scmp.ne.s32.totalorder %s97, %s98
      %p109 = scmp.eq.s32.totalorder %s21, 0
      %p110 = por %p108, %p109
      %p111 = scmp.ne.s32.totalorder %s97, %s98
      %p112 = scmp.eq.s32.totalorder %s22, 3
      %p113 = por %p111, %p112
      %p115 = scmp.ne.s32.totalorder %s98, %s114
      %p116 = scmp.eq.s32.totalorder %s22, 0
      %p117 = por %p115, %p116
      %p118 = scmp.le.s32.totalorder 1, %s16
      %p119 = scmp.lt.s32.totalorder %s16, 5
      %p120 = pnand %p118, %p119
      %p121 = pneg %p120
      // Predicated region
      $region9: #{tpu_custom_call.1} parent=5 // pred_check
        _
      $region10: #{tpu_custom_call.1} parent=5 // pred_check_branch
        %123 = sbr.rel (%p120) target = $region12
      $region11: #{tpu_custom_call.1} parent=5 // pred_region
        %s124 = ssub.s32 %s16, 1
        // Predicated region
        $region13: #{tpu_custom_call.1} parent=11 // pred_check
          %p125 = pneg %p63
        $region14: #{tpu_custom_call.1} parent=11 // pred_check_branch
          %127 = sbr.rel (%p125) target = $region16
        $region15: #{tpu_custom_call.1} parent=11 // pred_region
          %s129 = ssub.s32 10240, 10240
          %130 = vsyncadd [#allocation6], %s129
          %s131 = sshll.u32 [#allocation5], 4
          %s132 = int_to_ptr.vmem [resolvable:$true] %s131
          %137 = dma.hbm_to_vmem [thread:$0]  %s1, 10240, %s132, [#allocation6], 640, 640, 40
        $region16: #{tpu_custom_call.1} parent=11 // pred_fallthru
          _
        // Predicated region
        $region17: #{tpu_custom_call.1} parent=11 // pred_check
          %p138 = pneg %p84
        $region18: #{tpu_custom_call.1} parent=11 // pred_check_branch
          %140 = sbr.rel (%p138) target = $region20
        $region19: #{tpu_custom_call.1} parent=11 // pred_region
          %s142 = ssub.s32 2048, 2048
          %143 = vsyncadd [#allocation6], %s142
          %s144 = sshll.u32 [#allocation7], 4
          %s145 = int_to_ptr.vmem [resolvable:$true] %s144
          %150 = dma.hbm_to_vmem [thread:$0]  %s2, 2048, %s145, [#allocation6], 128, 128, 8
        $region20: #{tpu_custom_call.1} parent=11 // pred_fallthru
          _
      $region12: #{tpu_custom_call.1} parent=5 // pred_fallthru
        _
      %p151 = scmp.lt.s32.totalorder %s16, 4
      // Predicated region
      $region21: #{tpu_custom_call.1} parent=5 // pred_check
        %p152 = pneg %p151
      $region22: #{tpu_custom_call.1} parent=5 // pred_check_branch
        %154 = sbr.rel (%p152) target = $region24
      $region23: #{tpu_custom_call.1} parent=5 // pred_region
        // Predicated region
        $region25: #{tpu_custom_call.1} parent=23 // pred_check
          %p155 = pneg %p36
        $region26: #{tpu_custom_call.1} parent=23 // pred_check_branch
          %157 = sbr.rel (%p155) target = $region28
        $region27: #{tpu_custom_call.1} parent=23 // pred_region
          %s158 = sand.u32 %s26, 1
          %s159 = scalar_lea.sflag [#allocation3], %s158
          %s160 = sand.u32 %s26, 1
          %s161 = smul.addr %s160, 256
          %s162 = scalar_lea.vmem [#allocation2], %s161
          %s163 = smul.u32 32, %s16
          %s165 = ssub.s32 4096, 4096
          %166 = vsyncadd %s159, %s165
          %s167 = smul.addr %s163, 128
          %s168 = scalar_lea.hbm %s0, %s167
          %s169 = sshll.u32 %s162, 4
          %s170 = int_to_ptr.vmem [resolvable:$true] %s169
          %175 = dma.hbm_to_vmem [thread:$0]  %s168, 4096, %s170, %s159, 128, 128, 8
        $region28: #{tpu_custom_call.1} parent=23 // pred_fallthru
          _
      $region24: #{tpu_custom_call.1} parent=5 // pred_fallthru
        _
      %p176 = scmp.le.s32.totalorder 1, %s16
      %p177 = scmp.lt.s32.totalorder %s16, 5
      %p178 = pnand %p176, %p177
      %p179 = pneg %p178
      // Predicated region
      $region29: #{tpu_custom_call.1} parent=5 // pred_check
        _
      $region30: #{tpu_custom_call.1} parent=5 // pred_check_branch
        %181 = sbr.rel (%p178) target = $region32
      $region31: #{tpu_custom_call.1} parent=5 // pred_region
        %s182 = ssub.s32 %s16, 1
        %s183 = sand.u32 %s29, 1
        %s184 = scalar_lea.sflag [#allocation3], %s183
        %s185 = sand.u32 %s29, 1
        %s186 = smul.addr %s185, 256
        %s187 = scalar_lea.vmem [#allocation2], %s186
        // Predicated region
        $region33: #{tpu_custom_call.1} parent=31 // pred_check
          %p188 = pneg %p42
        $region34: #{tpu_custom_call.1} parent=31 // pred_check_branch
          %190 = sbr.rel (%p188) target = $region36
        $region35: #{tpu_custom_call.1} parent=31 // pred_region
          %191 = dma.done %s184, 4096
        $region36: #{tpu_custom_call.1} parent=31 // pred_fallthru
          _
        // Predicated region
        $region37: #{tpu_custom_call.1} parent=31 // pred_check
          %p192 = pneg %p63
        $region38: #{tpu_custom_call.1} parent=31 // pred_check_branch
          %194 = sbr.rel (%p192) target = $region40
        $region39: #{tpu_custom_call.1} parent=31 // pred_region
          %195 = dma.done [#allocation6], 10240
        $region40: #{tpu_custom_call.1} parent=31 // pred_fallthru
          _
        // Predicated region
        $region41: #{tpu_custom_call.1} parent=31 // pred_check
          %p196 = pneg %p84
        $region42: #{tpu_custom_call.1} parent=31 // pred_check_branch
          %198 = sbr.rel (%p196) target = $region44
        $region43: #{tpu_custom_call.1} parent=31 // pred_region
          %199 = dma.done [#allocation6], 2048
        $region44: #{tpu_custom_call.1} parent=31 // pred_fallthru
          _
        %s200 = sand.u32 %s29, 1
        %s201 = scalar_lea.sflag [#allocation3], %s200
        %s202 = sand.u32 %s29, 1
        %s203 = smul.addr %s202, 256
        %s204 = scalar_lea.vmem [#allocation2], %s203
        %p205 = pneg %p42
        %p206 = pneg %p39
        %p207 = pneg %p63
        %p208 = pneg %p60
        %p209 = pneg %p84
        %p210 = pneg %p81
        %p211 = pneg %p110
        %p212 = pneg %p107
        %s213 = sand.u32 %s97, 1
        %s214 = scalar_lea.sflag [#allocation4], %s213
        %s215 = sand.u32 %s97, 1
        %s216 = smul.addr %s215, 256
        %s217 = scalar_lea.vmem [#allocation8], %s216
        %s218 = smul.u32 32, %s21
        %s219 = smul.u32 32, %s21
        %v220 = vld [vmem:[%s187] sm:$0xff]
        %v221 = vld [vmem:[%s187 + $0x8] sm:$0xff]
        %v222 = vld [vmem:[%s187 + $0x10] sm:$0xff]
        %v223 = vld [vmem:[%s187 + $0x18] sm:$0xff]
        %v224 = vld [vmem:[%s187 + $0x20] sm:$0xff]
        %v225 = vld [vmem:[%s187 + $0x28] sm:$0xff]
        %v226 = vld [vmem:[%s187 + $0x30] sm:$0xff]
        %v227 = vld [vmem:[%s187 + $0x38] sm:$0xff]
        %v228 = vld [vmem:[%s187 + $0x40] sm:$0xff]
        %v229 = vld [vmem:[%s187 + $0x48] sm:$0xff]
        %v230 = vld [vmem:[%s187 + $0x50] sm:$0xff]
        %v231 = vld [vmem:[%s187 + $0x58] sm:$0xff]
        %v232 = vld [vmem:[%s187 + $0x60] sm:$0xff]
        %v233 = vld [vmem:[%s187 + $0x68] sm:$0xff]
        %v234 = vld [vmem:[%s187 + $0x70] sm:$0xff]
        %v235 = vld [vmem:[%s187 + $0x78] sm:$0xff]
        %v236 = vld [vmem:[%s187 + $0x80] sm:$0xff]
        %v237 = vld [vmem:[%s187 + $0x88] sm:$0xff]
        %v238 = vld [vmem:[%s187 + $0x90] sm:$0xff]
        %v239 = vld [vmem:[%s187 + $0x98] sm:$0xff]
        %v240 = vld [vmem:[%s187 + $0xa0] sm:$0xff]
        %v241 = vld [vmem:[%s187 + $0xa8] sm:$0xff]
        %v242 = vld [vmem:[%s187 + $0xb0] sm:$0xff]
        %v243 = vld [vmem:[%s187 + $0xb8] sm:$0xff]
        %v244 = vld [vmem:[%s187 + $0xc0] sm:$0xff]
        %v245 = vld [vmem:[%s187 + $0xc8] sm:$0xff]
        %v246 = vld [vmem:[%s187 + $0xd0] sm:$0xff]
        %v247 = vld [vmem:[%s187 + $0xd8] sm:$0xff]
        %v248 = vld [vmem:[%s187 + $0xe0] sm:$0xff]
        %v249 = vld [vmem:[%s187 + $0xe8] sm:$0xff]
        %v250 = vld [vmem:[%s187 + $0xf0] sm:$0xff]
        %v251 = vld [vmem:[%s187 + $0xf8] sm:$0xff]
        %v252 = vld [vmem:[#allocation7] sm:$0xff]
        %v253 = vld [vmem:[#allocation7 + $0x8] sm:$0xff]
        %v254 = vld [vmem:[#allocation7 + $0x10] sm:$0xff]
        %v255 = vld [vmem:[#allocation7 + $0x18] sm:$0xff]
        %v256 = vld [vmem:[#allocation7 + $0x20] sm:$0xff]
        %v257 = vld [vmem:[#allocation7 + $0x28] sm:$0xff]
        %v258 = vld [vmem:[#allocation7 + $0x30] sm:$0xff]
        %v259 = vld [vmem:[#allocation7 + $0x38] sm:$0xff]
        %v260 = vld [vmem:[#allocation7 + $0x40] sm:$0xff]
        %v261 = vld [vmem:[#allocation7 + $0x48] sm:$0xff]
        %v262 = vld [vmem:[#allocation7 + $0x50] sm:$0xff]
        %v263 = vld [vmem:[#allocation7 + $0x58] sm:$0xff]
        %v264 = vld [vmem:[#allocation7 + $0x60] sm:$0xff]
        %v265 = vld [vmem:[#allocation7 + $0x68] sm:$0xff]
        %v266 = vld [vmem:[#allocation7 + $0x70] sm:$0xff]
        %v267 = vld [vmem:[#allocation7 + $0x78] sm:$0xff]
        %v268 = vld [vmem:[#allocation5] sm:$0xff]
        %v269 = vld [vmem:[#allocation5 + $0x28] sm:$0xff]
        %v270 = vld [vmem:[#allocation5 + $0x50] sm:$0xff]
        %v271 = vld [vmem:[#allocation5 + $0x78] sm:$0xff]
        %v272 = vld [vmem:[#allocation5 + $0xa0] sm:$0xff]
        %v273 = vld [vmem:[#allocation5 + $0xc8] sm:$0xff]
        %v274 = vld [vmem:[#allocation5 + $0xf0] sm:$0xff]
        %v275 = vld [vmem:[#allocation5 + $0x118] sm:$0xff]
        %v276 = vld [vmem:[#allocation5 + $0x140] sm:$0xff]
        %v277 = vld [vmem:[#allocation5 + $0x168] sm:$0xff]
        %v278 = vld [vmem:[#allocation5 + $0x190] sm:$0xff]
        %v279 = vld [vmem:[#allocation5 + $0x1b8] sm:$0xff]
        %v280 = vld [vmem:[#allocation5 + $0x1e0] sm:$0xff]
        %v281 = vld [vmem:[#allocation5 + $0x208] sm:$0xff]
        %v282 = vld [vmem:[#allocation5 + $0x230] sm:$0xff]
        %v283 = vld [vmem:[#allocation5 + $0x258] sm:$0xff]
        %v284 = vld [vmem:[#allocation5 + $0x8] sm:$0xff]
        %v285 = vld [vmem:[#allocation5 + $0x30] sm:$0xff]
        %v286 = vld [vmem:[#allocation5 + $0x58] sm:$0xff]
        %v287 = vld [vmem:[#allocation5 + $0x80] sm:$0xff]
        %v288 = vld [vmem:[#allocation5 + $0xa8] sm:$0xff]
        %v289 = vld [vmem:[#allocation5 + $0xd0] sm:$0xff]
        %v290 = vld [vmem:[#allocation5 + $0xf8] sm:$0xff]
        %v291 = vld [vmem:[#allocation5 + $0x120] sm:$0xff]
        %v292 = vld [vmem:[#allocation5 + $0x148] sm:$0xff]
        %v293 = vld [vmem:[#allocation5 + $0x170] sm:$0xff]
        %v294 = vld [vmem:[#allocation5 + $0x198] sm:$0xff]
        %v295 = vld [vmem:[#allocation5 + $0x1c0] sm:$0xff]
        %v296 = vld [vmem:[#allocation5 + $0x1e8] sm:$0xff]
        %v297 = vld [vmem:[#allocation5 + $0x210] sm:$0xff]
        %v298 = vld [vmem:[#allocation5 + $0x238] sm:$0xff]
        %v299 = vld [vmem:[#allocation5 + $0x260] sm:$0xff]
        %300 = vmatprep.subr.mxu0 0.0
        %301 = vmatpush1.msra.mxu0 %v299
        %302 = vmatprep.subr.mxu0 0.0
        %303 = vmatpush1.msra.mxu0 %v298
        %304 = vmatprep.subr.mxu0 0.0
        %305 = vmatpush1.msra.mxu0 %v297
        %306 = vmatprep.subr.mxu0 0.0
        %307 = vmatpush1.msra.mxu0 %v296
        %308 = vmatprep.subr.mxu0 0.0
        %309 = vmatpush1.msra.mxu0 %v295
        %310 = vmatprep.subr.mxu0 0.0
        %311 = vmatpush1.msra.mxu0 %v294
        %312 = vmatprep.subr.mxu0 0.0
        %313 = vmatpush1.msra.mxu0 %v293
        %314 = vmatprep.subr.mxu0 0.0
        %315 = vmatpush1.msra.mxu0 %v292
        %316 = vmatprep.subr.mxu0 0.0
        %317 = vmatpush1.msra.mxu0 %v291
        %318 = vmatprep.subr.mxu0 0.0
        %319 = vmatpush1.msra.mxu0 %v290
        %320 = vmatprep.subr.mxu0 0.0
        %321 = vmatpush1.msra.mxu0 %v289
        %322 = vmatprep.subr.mxu0 0.0
        %323 = vmatpush1.msra.mxu0 %v288
        %324 = vmatprep.subr.mxu0 0.0
        %325 = vmatpush1.msra.mxu0 %v287
        %326 = vmatprep.subr.mxu0 0.0
        %327 = vmatpush1.msra.mxu0 %v286
        %328 = vmatprep.subr.mxu0 0.0
        %329 = vmatpush1.msra.mxu0 %v285
        %330 = vmatprep.subr.mxu0 0.0
        %331 = vmatpush1.msra.mxu0 %v284
        %332 = vmatprep.subr.mxu0 0.0
        %333 = vmatpush2.msra.mxu0 0.0
        %334 = vmatprep.subr.mxu0 0.0
        %335 = vmatpush2.msra.mxu0 0.0
        %336 = vmatprep.subr.mxu0 0.0
        %337 = vmatpush2.msra.mxu0 0.0
        %338 = vmatprep.subr.mxu0 0.0
        %339 = vmatpush2.msra.mxu0 0.0
        %340 = vmatprep.subr.mxu0 0.0
        %341 = vmatpush2.msra.mxu0 0.0
        %342 = vmatprep.subr.mxu0 0.0
        %343 = vmatpush2.msra.mxu0 0.0
        %344 = vmatprep.subr.mxu0 0.0
        %345 = vmatpush2.msra.mxu0 0.0
        %346 = vmatprep.subr.mxu0 0.0
        %347 = vmatpush2.msra.mxu0 0.0
        %348 = vmatprep.subr.mxu0 0.0
        %349 = vmatpush2.msra.mxu0 0.0
        %350 = vmatprep.subr.mxu0 0.0
        %351 = vmatpush2.msra.mxu0 0.0
        %352 = vmatprep.subr.mxu0 0.0
        %353 = vmatpush2.msra.mxu0 0.0
        %354 = vmatprep.subr.mxu0 0.0
        %355 = vmatpush2.msra.mxu0 0.0
        %356 = vmatprep.subr.mxu0 0.0
        %357 = vmatpush2.msra.mxu0 0.0
        %358 = vmatprep.subr.mxu0 0.0
        %359 = vmatpush2.msra.mxu0 0.0
        %360 = vmatprep.subr.mxu0 0.0
        %361 = vmatpush2.msra.mxu0 0.0
        %362 = vmatprep.subr.mxu0 0.0
        %363 = vmatpush2.msra.mxu0 0.0
        %364 = vmatprep.mubr.f32.mxu0 0.0
        %365 = vmatmul.mubr.f32.gmra.mxu0 %v220
        %v366 = vpop.f32.mrf.mxu0
        %v367 = vadd.f32 0.0, %v366
        %v368 = vpop.f32.mrf.mxu0
        %369 = vmatprep.mubr.f32.mxu0 0.0
        %370 = vmatmul.mubr.f32.gmra.mxu0 %v221
        %v371 = vpop.f32.mrf.mxu0
        %v372 = vadd.f32 0.0, %v371
        %v373 = vpop.f32.mrf.mxu0
        %374 = vmatprep.mubr.f32.mxu0 0.0
        %375 = vmatmul.mubr.f32.gmra.mxu0 %v222
        %v376 = vpop.f32.mrf.mxu0
        %v377 = vadd.f32 0.0, %v376
        %v378 = vpop.f32.mrf.mxu0
        %379 = vmatprep.mubr.f32.mxu0 0.0
        %380 = vmatmul.mubr.f32.gmra.mxu0 %v223
        %v381 = vpop.f32.mrf.mxu0
        %v382 = vadd.f32 0.0, %v381
        %v383 = vpop.f32.mrf.mxu0
        %384 = vmatprep.mubr.f32.mxu0 0.0
        %385 = vmatmul.mubr.f32.gmra.mxu0 %v224
        %v386 = vpop.f32.mrf.mxu0
        %v387 = vadd.f32 0.0, %v386
        %v388 = vpop.f32.mrf.mxu0
        %389 = vmatprep.mubr.f32.mxu0 0.0
        %390 = vmatmul.mubr.f32.gmra.mxu0 %v225
        %v391 = vpop.f32.mrf.mxu0
        %v392 = vadd.f32 0.0, %v391
        %v393 = vpop.f32.mrf.mxu0
        %394 = vmatprep.mubr.f32.mxu0 0.0
        %395 = vmatmul.mubr.f32.gmra.mxu0 %v226
        %v396 = vpop.f32.mrf.mxu0
        %v397 = vadd.f32 0.0, %v396
        %v398 = vpop.f32.mrf.mxu0
        %399 = vmatprep.mubr.f32.mxu0 0.0
        %400 = vmatmul.mubr.f32.gmra.mxu0 %v227
        %v401 = vpop.f32.mrf.mxu0
        %v402 = vadd.f32 0.0, %v401
        %v403 = vpop.f32.mrf.mxu0
        %404 = vmatprep.mubr.f32.mxu0 0.0
        %405 = vmatmul.mubr.f32.gmra.mxu0 %v228
        %v406 = vpop.f32.mrf.mxu0
        %v407 = vadd.f32 0.0, %v406
        %v408 = vpop.f32.mrf.mxu0
        %409 = vmatprep.mubr.f32.mxu0 0.0
        %410 = vmatmul.mubr.f32.gmra.mxu0 %v229
        %v411 = vpop.f32.mrf.mxu0
        %v412 = vadd.f32 0.0, %v411
        %v413 = vpop.f32.mrf.mxu0
        %414 = vmatprep.mubr.f32.mxu0 0.0
        %415 = vmatmul.mubr.f32.gmra.mxu0 %v230
        %v416 = vpop.f32.mrf.mxu0
        %v417 = vadd.f32 0.0, %v416
        %v418 = vpop.f32.mrf.mxu0
        %419 = vmatprep.mubr.f32.mxu0 0.0
        %420 = vmatmul.mubr.f32.gmra.mxu0 %v231
        %v421 = vpop.f32.mrf.mxu0
        %v422 = vadd.f32 0.0, %v421
        %v423 = vpop.f32.mrf.mxu0
        %424 = vmatprep.mubr.f32.mxu0 0.0
        %425 = vmatmul.mubr.f32.gmra.mxu0 %v232
        %v426 = vpop.f32.mrf.mxu0
        %v427 = vadd.f32 0.0, %v426
        %v428 = vpop.f32.mrf.mxu0
        %429 = vmatprep.mubr.f32.mxu0 0.0
        %430 = vmatmul.mubr.f32.gmra.mxu0 %v233
        %v431 = vpop.f32.mrf.mxu0
        %v432 = vadd.f32 0.0, %v431
        %v433 = vpop.f32.mrf.mxu0
        %434 = vmatprep.mubr.f32.mxu0 0.0
        %435 = vmatmul.mubr.f32.gmra.mxu0 %v234
        %v436 = vpop.f32.mrf.mxu0
        %v437 = vadd.f32 0.0, %v436
        %v438 = vpop.f32.mrf.mxu0
        %439 = vmatprep.mubr.f32.mxu0 0.0
        %440 = vmatmul.mubr.f32.gmra.mxu0 %v235
        %v441 = vpop.f32.mrf.mxu0
        %v442 = vadd.f32 0.0, %v441
        %v443 = vpop.f32.mrf.mxu0
        %444 = vmatprep.mubr.f32.mxu0 0.0
        %445 = vmatmul.mubr.f32.gmra.mxu0 %v236
        %v446 = vpop.f32.mrf.mxu0
        %v447 = vadd.f32 0.0, %v446
        %v448 = vpop.f32.mrf.mxu0
        %449 = vmatprep.mubr.f32.mxu0 0.0
        %450 = vmatmul.mubr.f32.gmra.mxu0 %v237
        %v451 = vpop.f32.mrf.mxu0
        %v452 = vadd.f32 0.0, %v451
        %v453 = vpop.f32.mrf.mxu0
        %454 = vmatprep.mubr.f32.mxu0 0.0
        %455 = vmatmul.mubr.f32.gmra.mxu0 %v238
        %v456 = vpop.f32.mrf.mxu0
        %v457 = vadd.f32 0.0, %v456
        %v458 = vpop.f32.mrf.mxu0
        %459 = vmatprep.mubr.f32.mxu0 0.0
        %460 = vmatmul.mubr.f32.gmra.mxu0 %v239
        %v461 = vpop.f32.mrf.mxu0
        %v462 = vadd.f32 0.0, %v461
        %v463 = vpop.f32.mrf.mxu0
        %464 = vmatprep.mubr.f32.mxu0 0.0
        %465 = vmatmul.mubr.f32.gmra.mxu0 %v240
        %v466 = vpop.f32.mrf.mxu0
        %v467 = vadd.f32 0.0, %v466
        %v468 = vpop.f32.mrf.mxu0
        %469 = vmatprep.mubr.f32.mxu0 0.0
        %470 = vmatmul.mubr.f32.gmra.mxu0 %v241
        %v471 = vpop.f32.mrf.mxu0
        %v472 = vadd.f32 0.0, %v471
        %v473 = vpop.f32.mrf.mxu0
        %474 = vmatprep.mubr.f32.mxu0 0.0
        %475 = vmatmul.mubr.f32.gmra.mxu0 %v242
        %v476 = vpop.f32.mrf.mxu0
        %v477 = vadd.f32 0.0, %v476
        %v478 = vpop.f32.mrf.mxu0
        %479 = vmatprep.mubr.f32.mxu0 0.0
        %480 = vmatmul.mubr.f32.gmra.mxu0 %v243
        %v481 = vpop.f32.mrf.mxu0
        %v482 = vadd.f32 0.0, %v481
        %v483 = vpop.f32.mrf.mxu0
        %484 = vmatprep.mubr.f32.mxu0 0.0
        %485 = vmatmul.mubr.f32.gmra.mxu0 %v244
        %v486 = vpop.f32.mrf.mxu0
        %v487 = vadd.f32 0.0, %v486
        %v488 = vpop.f32.mrf.mxu0
        %489 = vmatprep.mubr.f32.mxu0 0.0
        %490 = vmatmul.mubr.f32.gmra.mxu0 %v245
        %v491 = vpop.f32.mrf.mxu0
        %v492 = vadd.f32 0.0, %v491
        %v493 = vpop.f32.mrf.mxu0
        %494 = vmatprep.mubr.f32.mxu0 0.0
        %495 = vmatmul.mubr.f32.gmra.mxu0 %v246
        %v496 = vpop.f32.mrf.mxu0
        %v497 = vadd.f32 0.0, %v496
        %v498 = vpop.f32.mrf.mxu0
        %499 = vmatprep.mubr.f32.mxu0 0.0
        %500 = vmatmul.mubr.f32.gmra.mxu0 %v247
        %v501 = vpop.f32.mrf.mxu0
        %v502 = vadd.f32 0.0, %v501
        %v503 = vpop.f32.mrf.mxu0
        %504 = vmatprep.mubr.f32.mxu0 0.0
        %505 = vmatmul.mubr.f32.gmra.mxu0 %v248
        %v506 = vpop.f32.mrf.mxu0
        %v507 = vadd.f32 0.0, %v506
        %v508 = vpop.f32.mrf.mxu0
        %509 = vmatprep.mubr.f32.mxu0 0.0
        %510 = vmatmul.mubr.f32.gmra.mxu0 %v249
        %v511 = vpop.f32.mrf.mxu0
        %v512 = vadd.f32 0.0, %v511
        %v513 = vpop.f32.mrf.mxu0
        %514 = vmatprep.mubr.f32.mxu0 0.0
        %515 = vmatmul.mubr.f32.gmra.mxu0 %v250
        %v516 = vpop.f32.mrf.mxu0
        %v517 = vadd.f32 0.0, %v516
        %v518 = vpop.f32.mrf.mxu0
        %519 = vmatprep.mubr.f32.mxu0 0.0
        %520 = vmatmul.mubr.f32.gmra.mxu0 %v251
        %v521 = vpop.f32.mrf.mxu0
        %v522 = vadd.f32 0.0, %v521
        %v523 = vpop.f32.mrf.mxu0
        %524 = vdwg.mxu0
        %v525 = vld [vmem:[#allocation5 + $0x18] sm:$0xff]
        %v526 = vld [vmem:[#allocation5 + $0x40] sm:$0xff]
        %v527 = vld [vmem:[#allocation5 + $0x68] sm:$0xff]
        %v528 = vld [vmem:[#allocation5 + $0x90] sm:$0xff]
        %v529 = vld [vmem:[#allocation5 + $0xb8] sm:$0xff]
        %v530 = vld [vmem:[#allocation5 + $0xe0] sm:$0xff]
        %v531 = vld [vmem:[#allocation5 + $0x108] sm:$0xff]
        %v532 = vld [vmem:[#allocation5 + $0x130] sm:$0xff]
        %v533 = vld [vmem:[#allocation5 + $0x158] sm:$0xff]
        %v534 = vld [vmem:[#allocation5 + $0x180] sm:$0xff]
        %v535 = vld [vmem:[#allocation5 + $0x1a8] sm:$0xff]
        %v536 = vld [vmem:[#allocation5 + $0x1d0] sm:$0xff]
        %v537 = vld [vmem:[#allocation5 + $0x1f8] sm:$0xff]
        %v538 = vld [vmem:[#allocation5 + $0x220] sm:$0xff]
        %v539 = vld [vmem:[#allocation5 + $0x248] sm:$0xff]
        %v540 = vld [vmem:[#allocation5 + $0x270] sm:$0xff]
        %541 = vmatprep.subr.mxu0 0.0
        %542 = vmatpush1.msra.mxu0 %v540
        %543 = vmatprep.subr.mxu0 0.0
        %544 = vmatpush1.msra.mxu0 %v539
        %545 = vmatprep.subr.mxu0 0.0
        %546 = vmatpush1.msra.mxu0 %v538
        %547 = vmatprep.subr.mxu0 0.0
        %548 = vmatpush1.msra.mxu0 %v537
        %549 = vmatprep.subr.mxu0 0.0
        %550 = vmatpush1.msra.mxu0 %v536
        %551 = vmatprep.subr.mxu0 0.0
        %552 = vmatpush1.msra.mxu0 %v535
        %553 = vmatprep.subr.mxu0 0.0
        %554 = vmatpush1.msra.mxu0 %v534
        %555 = vmatprep.subr.mxu0 0.0
        %556 = vmatpush1.msra.mxu0 %v533
        %557 = vmatprep.subr.mxu0 0.0
        %558 = vmatpush1.msra.mxu0 %v532
        %559 = vmatprep.subr.mxu0 0.0
        %560 = vmatpush1.msra.mxu0 %v531
        %561 = vmatprep.subr.mxu0 0.0
        %562 = vmatpush1.msra.mxu0 %v530
        %563 = vmatprep.subr.mxu0 0.0
        %564 = vmatpush1.msra.mxu0 %v529
        %565 = vmatprep.subr.mxu0 0.0
        %566 = vmatpush1.msra.mxu0 %v528
        %567 = vmatprep.subr.mxu0 0.0
        %568 = vmatpush1.msra.mxu0 %v527
        %569 = vmatprep.subr.mxu0 0.0
        %570 = vmatpush1.msra.mxu0 %v526
        %571 = vmatprep.subr.mxu0 0.0
        %572 = vmatpush1.msra.mxu0 %v525
        %573 = vmatprep.subr.mxu0 0.0
        %574 = vmatpush2.msra.mxu0 0.0
        %575 = vmatprep.subr.mxu0 0.0
        %576 = vmatpush2.msra.mxu0 0.0
        %577 = vmatprep.subr.mxu0 0.0
        %578 = vmatpush2.msra.mxu0 0.0
        %579 = vmatprep.subr.mxu0 0.0
        %580 = vmatpush2.msra.mxu0 0.0
        %581 = vmatprep.subr.mxu0 0.0
        %582 = vmatpush2.msra.mxu0 0.0
        %583 = vmatprep.subr.mxu0 0.0
        %584 = vmatpush2.msra.mxu0 0.0
        %585 = vmatprep.subr.mxu0 0.0
        %586 = vmatpush2.msra.mxu0 0.0
        %587 = vmatprep.subr.mxu0 0.0
        %588 = vmatpush2.msra.mxu0 0.0
        %589 = vmatprep.subr.mxu0 0.0
        %590 = vmatpush2.msra.mxu0 0.0
        %591 = vmatprep.subr.mxu0 0.0
        %592 = vmatpush2.msra.mxu0 0.0
        %593 = vmatprep.subr.mxu0 0.0
        %594 = vmatpush2.msra.mxu0 0.0
        %595 = vmatprep.subr.mxu0 0.0
        %596 = vmatpush2.msra.mxu0 0.0
        %597 = vmatprep.subr.mxu0 0.0
        %598 = vmatpush2.msra.mxu0 0.0
        %599 = vmatprep.subr.mxu0 0.0
        %600 = vmatpush2.msra.mxu0 0.0
        %601 = vmatprep.subr.mxu0 0.0
        %602 = vmatpush2.msra.mxu0 0.0
        %603 = vmatprep.subr.mxu0 0.0
        %604 = vmatpush2.msra.mxu0 0.0
        %605 = vmatprep.mubr.f32.mxu0 0.0
        %606 = vmatmul.mubr.f32.gmra.mxu0 %v220
        %v607 = vpop.f32.mrf.mxu0
        %v608 = vadd.f32 0.0, %v607
        %v609 = vpop.f32.mrf.mxu0
        %610 = vmatprep.mubr.f32.mxu0 0.0
        %611 = vmatmul.mubr.f32.gmra.mxu0 %v221
        %v612 = vpop.f32.mrf.mxu0
        %v613 = vadd.f32 0.0, %v612
        %v614 = vpop.f32.mrf.mxu0
        %615 = vmatprep.mubr.f32.mxu0 0.0
        %616 = vmatmul.mubr.f32.gmra.mxu0 %v222
        %v617 = vpop.f32.mrf.mxu0
        %v618 = vadd.f32 0.0, %v617
        %v619 = vpop.f32.mrf.mxu0
        %620 = vmatprep.mubr.f32.mxu0 0.0
        %621 = vmatmul.mubr.f32.gmra.mxu0 %v223
        %v622 = vpop.f32.mrf.mxu0
        %v623 = vadd.f32 0.0, %v622
        %v624 = vpop.f32.mrf.mxu0
        %625 = vmatprep.mubr.f32.mxu0 0.0
        %626 = vmatmul.mubr.f32.gmra.mxu0 %v224
        %v627 = vpop.f32.mrf.mxu0
        %v628 = vadd.f32 0.0, %v627
        %v629 = vpop.f32.mrf.mxu0
        %630 = vmatprep.mubr.f32.mxu0 0.0
        %631 = vmatmul.mubr.f32.gmra.mxu0 %v225
        %v632 = vpop.f32.mrf.mxu0
        %v633 = vadd.f32 0.0, %v632
        %v634 = vpop.f32.mrf.mxu0
        %635 = vmatprep.mubr.f32.mxu0 0.0
        %636 = vmatmul.mubr.f32.gmra.mxu0 %v226
        %v637 = vpop.f32.mrf.mxu0
        %v638 = vadd.f32 0.0, %v637
        %v639 = vpop.f32.mrf.mxu0
        %640 = vmatprep.mubr.f32.mxu0 0.0
        %641 = vmatmul.mubr.f32.gmra.mxu0 %v227
        %v642 = vpop.f32.mrf.mxu0
        %v643 = vadd.f32 0.0, %v642
        %v644 = vpop.f32.mrf.mxu0
        %645 = vmatprep.mubr.f32.mxu0 0.0
        %646 = vmatmul.mubr.f32.gmra.mxu0 %v228
        %v647 = vpop.f32.mrf.mxu0
        %v648 = vadd.f32 0.0, %v647
        %v649 = vpop.f32.mrf.mxu0
        %650 = vmatprep.mubr.f32.mxu0 0.0
        %651 = vmatmul.mubr.f32.gmra.mxu0 %v229
        %v652 = vpop.f32.mrf.mxu0
        %v653 = vadd.f32 0.0, %v652
        %v654 = vpop.f32.mrf.mxu0
        %655 = vmatprep.mubr.f32.mxu0 0.0
        %656 = vmatmul.mubr.f32.gmra.mxu0 %v230
        %v657 = vpop.f32.mrf.mxu0
        %v658 = vadd.f32 0.0, %v657
        %v659 = vpop.f32.mrf.mxu0
        %660 = vmatprep.mubr.f32.mxu0 0.0
        %661 = vmatmul.mubr.f32.gmra.mxu0 %v231
        %v662 = vpop.f32.mrf.mxu0
        %v663 = vadd.f32 0.0, %v662
        %v664 = vpop.f32.mrf.mxu0
        %665 = vmatprep.mubr.f32.mxu0 0.0
        %666 = vmatmul.mubr.f32.gmra.mxu0 %v232
        %v667 = vpop.f32.mrf.mxu0
        %v668 = vadd.f32 0.0, %v667
        %v669 = vpop.f32.mrf.mxu0
        %670 = vmatprep.mubr.f32.mxu0 0.0
        %671 = vmatmul.mubr.f32.gmra.mxu0 %v233
        %v672 = vpop.f32.mrf.mxu0
        %v673 = vadd.f32 0.0, %v672
        %v674 = vpop.f32.mrf.mxu0
        %675 = vmatprep.mubr.f32.mxu0 0.0
        %676 = vmatmul.mubr.f32.gmra.mxu0 %v234
        %v677 = vpop.f32.mrf.mxu0
        %v678 = vadd.f32 0.0, %v677
        %v679 = vpop.f32.mrf.mxu0
        %680 = vmatprep.mubr.f32.mxu0 0.0
        %681 = vmatmul.mubr.f32.gmra.mxu0 %v235
        %v682 = vpop.f32.mrf.mxu0
        %v683 = vadd.f32 0.0, %v682
        %v684 = vpop.f32.mrf.mxu0
        %685 = vmatprep.mubr.f32.mxu0 0.0
        %686 = vmatmul.mubr.f32.gmra.mxu0 %v236
        %v687 = vpop.f32.mrf.mxu0
        %v688 = vadd.f32 0.0, %v687
        %v689 = vpop.f32.mrf.mxu0
        %690 = vmatprep.mubr.f32.mxu0 0.0
        %691 = vmatmul.mubr.f32.gmra.mxu0 %v237
        %v692 = vpop.f32.mrf.mxu0
        %v693 = vadd.f32 0.0, %v692
        %v694 = vpop.f32.mrf.mxu0
        %695 = vmatprep.mubr.f32.mxu0 0.0
        %696 = vmatmul.mubr.f32.gmra.mxu0 %v238
        %v697 = vpop.f32.mrf.mxu0
        %v698 = vadd.f32 0.0, %v697
        %v699 = vpop.f32.mrf.mxu0
        %700 = vmatprep.mubr.f32.mxu0 0.0
        %701 = vmatmul.mubr.f32.gmra.mxu0 %v239
        %v702 = vpop.f32.mrf.mxu0
        %v703 = vadd.f32 0.0, %v702
        %v704 = vpop.f32.mrf.mxu0
        %705 = vmatprep.mubr.f32.mxu0 0.0
        %706 = vmatmul.mubr.f32.gmra.mxu0 %v240
        %v707 = vpop.f32.mrf.mxu0
        %v708 = vadd.f32 0.0, %v707
        %v709 = vpop.f32.mrf.mxu0
        %710 = vmatprep.mubr.f32.mxu0 0.0
        %711 = vmatmul.mubr.f32.gmra.mxu0 %v241
        %v712 = vpop.f32.mrf.mxu0
        %v713 = vadd.f32 0.0, %v712
        %v714 = vpop.f32.mrf.mxu0
        %715 = vmatprep.mubr.f32.mxu0 0.0
        %716 = vmatmul.mubr.f32.gmra.mxu0 %v242
        %v717 = vpop.f32.mrf.mxu0
        %v718 = vadd.f32 0.0, %v717
        %v719 = vpop.f32.mrf.mxu0
        %720 = vmatprep.mubr.f32.mxu0 0.0
        %721 = vmatmul.mubr.f32.gmra.mxu0 %v243
        %v722 = vpop.f32.mrf.mxu0
        %v723 = vadd.f32 0.0, %v722
        %v724 = vpop.f32.mrf.mxu0
        %725 = vmatprep.mubr.f32.mxu0 0.0
        %726 = vmatmul.mubr.f32.gmra.mxu0 %v244
        %v727 = vpop.f32.mrf.mxu0
        %v728 = vadd.f32 0.0, %v727
        %v729 = vpop.f32.mrf.mxu0
        %730 = vmatprep.mubr.f32.mxu0 0.0
        %731 = vmatmul.mubr.f32.gmra.mxu0 %v245
        %v732 = vpop.f32.mrf.mxu0
        %v733 = vadd.f32 0.0, %v732
        %v734 = vpop.f32.mrf.mxu0
        %735 = vmatprep.mubr.f32.mxu0 0.0
        %736 = vmatmul.mubr.f32.gmra.mxu0 %v246
        %v737 = vpop.f32.mrf.mxu0
        %v738 = vadd.f32 0.0, %v737
        %v739 = vpop.f32.mrf.mxu0
        %740 = vmatprep.mubr.f32.mxu0 0.0
        %741 = vmatmul.mubr.f32.gmra.mxu0 %v247
        %v742 = vpop.f32.mrf.mxu0
        %v743 = vadd.f32 0.0, %v742
        %v744 = vpop.f32.mrf.mxu0
        %745 = vmatprep.mubr.f32.mxu0 0.0
        %746 = vmatmul.mubr.f32.gmra.mxu0 %v248
        %v747 = vpop.f32.mrf.mxu0
        %v748 = vadd.f32 0.0, %v747
        %v749 = vpop.f32.mrf.mxu0
        %750 = vmatprep.mubr.f32.mxu0 0.0
        %751 = vmatmul.mubr.f32.gmra.mxu0 %v249
        %v752 = vpop.f32.mrf.mxu0
        %v753 = vadd.f32 0.0, %v752
        %v754 = vpop.f32.mrf.mxu0
        %755 = vmatprep.mubr.f32.mxu0 0.0
        %756 = vmatmul.mubr.f32.gmra.mxu0 %v250
        %v757 = vpop.f32.mrf.mxu0
        %v758 = vadd.f32 0.0, %v757
        %v759 = vpop.f32.mrf.mxu0
        %760 = vmatprep.mubr.f32.mxu0 0.0
        %761 = vmatmul.mubr.f32.gmra.mxu0 %v251
        %v762 = vpop.f32.mrf.mxu0
        %v763 = vadd.f32 0.0, %v762
        %v764 = vpop.f32.mrf.mxu0
        %765 = vdwg.mxu0
        %v766 = vmul.f32 %v608, %v367
        %v767 = vmul.f32 %v613, %v372
        %v768 = vmul.f32 %v618, %v377
        %v769 = vmul.f32 %v623, %v382
        %v770 = vmul.f32 %v628, %v387
        %v771 = vmul.f32 %v633, %v392
        %v772 = vmul.f32 %v638, %v397
        %v773 = vmul.f32 %v643, %v402
        %v774 = vmul.f32 %v648, %v407
        %v775 = vmul.f32 %v653, %v412
        %v776 = vmul.f32 %v658, %v417
        %v777 = vmul.f32 %v663, %v422
        %v778 = vmul.f32 %v668, %v427
        %v779 = vmul.f32 %v673, %v432
        %v780 = vmul.f32 %v678, %v437
        %v781 = vmul.f32 %v683, %v442
        %v782 = vmul.f32 %v688, %v447
        %v783 = vmul.f32 %v693, %v452
        %v784 = vmul.f32 %v698, %v457
        %v785 = vmul.f32 %v703, %v462
        %v786 = vmul.f32 %v708, %v467
        %v787 = vmul.f32 %v713, %v472
        %v788 = vmul.f32 %v718, %v477
        %v789 = vmul.f32 %v723, %v482
        %v790 = vmul.f32 %v728, %v487
        %v791 = vmul.f32 %v733, %v492
        %v792 = vmul.f32 %v738, %v497
        %v793 = vmul.f32 %v743, %v502
        %v794 = vmul.f32 %v748, %v507
        %v795 = vmul.f32 %v753, %v512
        %v796 = vmul.f32 %v758, %v517
        %v797 = vmul.f32 %v763, %v522
        %v798 = vld [vmem:[#allocation5 + $0x10] sm:$0xff]
        %v799 = vld [vmem:[#allocation5 + $0x38] sm:$0xff]
        %v800 = vld [vmem:[#allocation5 + $0x60] sm:$0xff]
        %v801 = vld [vmem:[#allocation5 + $0x88] sm:$0xff]
        %v802 = vld [vmem:[#allocation5 + $0xb0] sm:$0xff]
        %v803 = vld [vmem:[#allocation5 + $0xd8] sm:$0xff]
        %v804 = vld [vmem:[#allocation5 + $0x100] sm:$0xff]
        %v805 = vld [vmem:[#allocation5 + $0x128] sm:$0xff]
        %v806 = vld [vmem:[#allocation5 + $0x150] sm:$0xff]
        %v807 = vld [vmem:[#allocation5 + $0x178] sm:$0xff]
        %v808 = vld [vmem:[#allocation5 + $0x1a0] sm:$0xff]
        %v809 = vld [vmem:[#allocation5 + $0x1c8] sm:$0xff]
        %v810 = vld [vmem:[#allocation5 + $0x1f0] sm:$0xff]
        %v811 = vld [vmem:[#allocation5 + $0x218] sm:$0xff]
        %v812 = vld [vmem:[#allocation5 + $0x240] sm:$0xff]
        %v813 = vld [vmem:[#allocation5 + $0x268] sm:$0xff]
        %814 = vmatprep.subr.mxu0 0.0
        %815 = vmatpush1.msra.mxu0 %v813
        %816 = vmatprep.subr.mxu0 0.0
        %817 = vmatpush1.msra.mxu0 %v812
        %818 = vmatprep.subr.mxu0 0.0
        %819 = vmatpush1.msra.mxu0 %v811
        %820 = vmatprep.subr.mxu0 0.0
        %821 = vmatpush1.msra.mxu0 %v810
        %822 = vmatprep.subr.mxu0 0.0
        %823 = vmatpush1.msra.mxu0 %v809
        %824 = vmatprep.subr.mxu0 0.0
        %825 = vmatpush1.msra.mxu0 %v808
        %826 = vmatprep.subr.mxu0 0.0
        %827 = vmatpush1.msra.mxu0 %v807
        %828 = vmatprep.subr.mxu0 0.0
        %829 = vmatpush1.msra.mxu0 %v806
        %830 = vmatprep.subr.mxu0 0.0
        %831 = vmatpush1.msra.mxu0 %v805
        %832 = vmatprep.subr.mxu0 0.0
        %833 = vmatpush1.msra.mxu0 %v804
        %834 = vmatprep.subr.mxu0 0.0
        %835 = vmatpush1.msra.mxu0 %v803
        %836 = vmatprep.subr.mxu0 0.0
        %837 = vmatpush1.msra.mxu0 %v802
        %838 = vmatprep.subr.mxu0 0.0
        %839 = vmatpush1.msra.mxu0 %v801
        %840 = vmatprep.subr.mxu0 0.0
        %841 = vmatpush1.msra.mxu0 %v800
        %842 = vmatprep.subr.mxu0 0.0
        %843 = vmatpush1.msra.mxu0 %v799
        %844 = vmatprep.subr.mxu0 0.0
        %845 = vmatpush1.msra.mxu0 %v798
        %846 = vmatprep.subr.mxu0 0.0
        %847 = vmatpush2.msra.mxu0 0.0
        %848 = vmatprep.subr.mxu0 0.0
        %849 = vmatpush2.msra.mxu0 0.0
        %850 = vmatprep.subr.mxu0 0.0
        %851 = vmatpush2.msra.mxu0 0.0
        %852 = vmatprep.subr.mxu0 0.0
        %853 = vmatpush2.msra.mxu0 0.0
        %854 = vmatprep.subr.mxu0 0.0
        %855 = vmatpush2.msra.mxu0 0.0
        %856 = vmatprep.subr.mxu0 0.0
        %857 = vmatpush2.msra.mxu0 0.0
        %858 = vmatprep.subr.mxu0 0.0
        %859 = vmatpush2.msra.mxu0 0.0
        %860 = vmatprep.subr.mxu0 0.0
        %861 = vmatpush2.msra.mxu0 0.0
        %862 = vmatprep.subr.mxu0 0.0
        %863 = vmatpush2.msra.mxu0 0.0
        %864 = vmatprep.subr.mxu0 0.0
        %865 = vmatpush2.msra.mxu0 0.0
        %866 = vmatprep.subr.mxu0 0.0
        %867 = vmatpush2.msra.mxu0 0.0
        %868 = vmatprep.subr.mxu0 0.0
        %869 = vmatpush2.msra.mxu0 0.0
        %870 = vmatprep.subr.mxu0 0.0
        %871 = vmatpush2.msra.mxu0 0.0
        %872 = vmatprep.subr.mxu0 0.0
        %873 = vmatpush2.msra.mxu0 0.0
        %874 = vmatprep.subr.mxu0 0.0
        %875 = vmatpush2.msra.mxu0 0.0
        %876 = vmatprep.subr.mxu0 0.0
        %877 = vmatpush2.msra.mxu0 0.0
        %878 = vmatprep.mubr.f32.mxu0 0.0
        %879 = vmatmul.mubr.f32.gmra.mxu0 %v220
        %v880 = vpop.f32.mrf.mxu0
        %v881 = vadd.f32 0.0, %v880
        %v882 = vpop.f32.mrf.mxu0
        %883 = vmatprep.mubr.f32.mxu0 0.0
        %884 = vmatmul.mubr.f32.gmra.mxu0 %v221
        %v885 = vpop.f32.mrf.mxu0
        %v886 = vadd.f32 0.0, %v885
        %v887 = vpop.f32.mrf.mxu0
        %888 = vmatprep.mubr.f32.mxu0 0.0
        %889 = vmatmul.mubr.f32.gmra.mxu0 %v222
        %v890 = vpop.f32.mrf.mxu0
        %v891 = vadd.f32 0.0, %v890
        %v892 = vpop.f32.mrf.mxu0
        %893 = vmatprep.mubr.f32.mxu0 0.0
        %894 = vmatmul.mubr.f32.gmra.mxu0 %v223
        %v895 = vpop.f32.mrf.mxu0
        %v896 = vadd.f32 0.0, %v895
        %v897 = vpop.f32.mrf.mxu0
        %898 = vmatprep.mubr.f32.mxu0 0.0
        %899 = vmatmul.mubr.f32.gmra.mxu0 %v224
        %v900 = vpop.f32.mrf.mxu0
        %v901 = vadd.f32 0.0, %v900
        %v902 = vpop.f32.mrf.mxu0
        %903 = vmatprep.mubr.f32.mxu0 0.0
        %904 = vmatmul.mubr.f32.gmra.mxu0 %v225
        %v905 = vpop.f32.mrf.mxu0
        %v906 = vadd.f32 0.0, %v905
        %v907 = vpop.f32.mrf.mxu0
        %908 = vmatprep.mubr.f32.mxu0 0.0
        %909 = vmatmul.mubr.f32.gmra.mxu0 %v226
        %v910 = vpop.f32.mrf.mxu0
        %v911 = vadd.f32 0.0, %v910
        %v912 = vpop.f32.mrf.mxu0
        %913 = vmatprep.mubr.f32.mxu0 0.0
        %914 = vmatmul.mubr.f32.gmra.mxu0 %v227
        %v915 = vpop.f32.mrf.mxu0
        %v916 = vadd.f32 0.0, %v915
        %v917 = vpop.f32.mrf.mxu0
        %918 = vmatprep.mubr.f32.mxu0 0.0
        %919 = vmatmul.mubr.f32.gmra.mxu0 %v228
        %v920 = vpop.f32.mrf.mxu0
        %v921 = vadd.f32 0.0, %v920
        %v922 = vpop.f32.mrf.mxu0
        %923 = vmatprep.mubr.f32.mxu0 0.0
        %924 = vmatmul.mubr.f32.gmra.mxu0 %v229
        %v925 = vpop.f32.mrf.mxu0
        %v926 = vadd.f32 0.0, %v925
        %v927 = vpop.f32.mrf.mxu0
        %928 = vmatprep.mubr.f32.mxu0 0.0
        %929 = vmatmul.mubr.f32.gmra.mxu0 %v230
        %v930 = vpop.f32.mrf.mxu0
        %v931 = vadd.f32 0.0, %v930
        %v932 = vpop.f32.mrf.mxu0
        %933 = vmatprep.mubr.f32.mxu0 0.0
        %934 = vmatmul.mubr.f32.gmra.mxu0 %v231
        %v935 = vpop.f32.mrf.mxu0
        %v936 = vadd.f32 0.0, %v935
        %v937 = vpop.f32.mrf.mxu0
        %938 = vmatprep.mubr.f32.mxu0 0.0
        %939 = vmatmul.mubr.f32.gmra.mxu0 %v232
        %v940 = vpop.f32.mrf.mxu0
        %v941 = vadd.f32 0.0, %v940
        %v942 = vpop.f32.mrf.mxu0
        %943 = vmatprep.mubr.f32.mxu0 0.0
        %944 = vmatmul.mubr.f32.gmra.mxu0 %v233
        %v945 = vpop.f32.mrf.mxu0
        %v946 = vadd.f32 0.0, %v945
        %v947 = vpop.f32.mrf.mxu0
        %948 = vmatprep.mubr.f32.mxu0 0.0
        %949 = vmatmul.mubr.f32.gmra.mxu0 %v234
        %v950 = vpop.f32.mrf.mxu0
        %v951 = vadd.f32 0.0, %v950
        %v952 = vpop.f32.mrf.mxu0
        %953 = vmatprep.mubr.f32.mxu0 0.0
        %954 = vmatmul.mubr.f32.gmra.mxu0 %v235
        %v955 = vpop.f32.mrf.mxu0
        %v956 = vadd.f32 0.0, %v955
        %v957 = vpop.f32.mrf.mxu0
        %958 = vmatprep.mubr.f32.mxu0 0.0
        %959 = vmatmul.mubr.f32.gmra.mxu0 %v236
        %v960 = vpop.f32.mrf.mxu0
        %v961 = vadd.f32 0.0, %v960
        %v962 = vpop.f32.mrf.mxu0
        %963 = vmatprep.mubr.f32.mxu0 0.0
        %964 = vmatmul.mubr.f32.gmra.mxu0 %v237
        %v965 = vpop.f32.mrf.mxu0
        %v966 = vadd.f32 0.0, %v965
        %v967 = vpop.f32.mrf.mxu0
        %968 = vmatprep.mubr.f32.mxu0 0.0
        %969 = vmatmul.mubr.f32.gmra.mxu0 %v238
        %v970 = vpop.f32.mrf.mxu0
        %v971 = vadd.f32 0.0, %v970
        %v972 = vpop.f32.mrf.mxu0
        %973 = vmatprep.mubr.f32.mxu0 0.0
        %974 = vmatmul.mubr.f32.gmra.mxu0 %v239
        %v975 = vpop.f32.mrf.mxu0
        %v976 = vadd.f32 0.0, %v975
        %v977 = vpop.f32.mrf.mxu0
        %978 = vmatprep.mubr.f32.mxu0 0.0
        %979 = vmatmul.mubr.f32.gmra.mxu0 %v240
        %v980 = vpop.f32.mrf.mxu0
        %v981 = vadd.f32 0.0, %v980
        %v982 = vpop.f32.mrf.mxu0
        %983 = vmatprep.mubr.f32.mxu0 0.0
        %984 = vmatmul.mubr.f32.gmra.mxu0 %v241
        %v985 = vpop.f32.mrf.mxu0
        %v986 = vadd.f32 0.0, %v985
        %v987 = vpop.f32.mrf.mxu0
        %988 = vmatprep.mubr.f32.mxu0 0.0
        %989 = vmatmul.mubr.f32.gmra.mxu0 %v242
        %v990 = vpop.f32.mrf.mxu0
        %v991 = vadd.f32 0.0, %v990
        %v992 = vpop.f32.mrf.mxu0
        %993 = vmatprep.mubr.f32.mxu0 0.0
        %994 = vmatmul.mubr.f32.gmra.mxu0 %v243
        %v995 = vpop.f32.mrf.mxu0
        %v996 = vadd.f32 0.0, %v995
        %v997 = vpop.f32.mrf.mxu0
        %998 = vmatprep.mubr.f32.mxu0 0.0
        %999 = vmatmul.mubr.f32.gmra.mxu0 %v244
        %v1000 = vpop.f32.mrf.mxu0
        %v1001 = vadd.f32 0.0, %v1000
        %v1002 = vpop.f32.mrf.mxu0
        %1003 = vmatprep.mubr.f32.mxu0 0.0
        %1004 = vmatmul.mubr.f32.gmra.mxu0 %v245
        %v1005 = vpop.f32.mrf.mxu0
        %v1006 = vadd.f32 0.0, %v1005
        %v1007 = vpop.f32.mrf.mxu0
        %1008 = vmatprep.mubr.f32.mxu0 0.0
        %1009 = vmatmul.mubr.f32.gmra.mxu0 %v246
        %v1010 = vpop.f32.mrf.mxu0
        %v1011 = vadd.f32 0.0, %v1010
        %v1012 = vpop.f32.mrf.mxu0
        %1013 = vmatprep.mubr.f32.mxu0 0.0
        %1014 = vmatmul.mubr.f32.gmra.mxu0 %v247
        %v1015 = vpop.f32.mrf.mxu0
        %v1016 = vadd.f32 0.0, %v1015
        %v1017 = vpop.f32.mrf.mxu0
        %1018 = vmatprep.mubr.f32.mxu0 0.0
        %1019 = vmatmul.mubr.f32.gmra.mxu0 %v248
        %v1020 = vpop.f32.mrf.mxu0
        %v1021 = vadd.f32 0.0, %v1020
        %v1022 = vpop.f32.mrf.mxu0
        %1023 = vmatprep.mubr.f32.mxu0 0.0
        %1024 = vmatmul.mubr.f32.gmra.mxu0 %v249
        %v1025 = vpop.f32.mrf.mxu0
        %v1026 = vadd.f32 0.0, %v1025
        %v1027 = vpop.f32.mrf.mxu0
        %1028 = vmatprep.mubr.f32.mxu0 0.0
        %1029 = vmatmul.mubr.f32.gmra.mxu0 %v250
        %v1030 = vpop.f32.mrf.mxu0
        %v1031 = vadd.f32 0.0, %v1030
        %v1032 = vpop.f32.mrf.mxu0
        %1033 = vmatprep.mubr.f32.mxu0 0.0
        %1034 = vmatmul.mubr.f32.gmra.mxu0 %v251
        %v1035 = vpop.f32.mrf.mxu0
        %v1036 = vadd.f32 0.0, %v1035
        %v1037 = vpop.f32.mrf.mxu0
        %1038 = vdwg.mxu0
        %v1039 = vld [vmem:[#allocation5 + $0x20] sm:$0xff]
        %v1040 = vld [vmem:[#allocation5 + $0x48] sm:$0xff]
        %v1041 = vld [vmem:[#allocation5 + $0x70] sm:$0xff]
        %v1042 = vld [vmem:[#allocation5 + $0x98] sm:$0xff]
        %v1043 = vld [vmem:[#allocation5 + $0xc0] sm:$0xff]
        %v1044 = vld [vmem:[#allocation5 + $0xe8] sm:$0xff]
        %v1045 = vld [vmem:[#allocation5 + $0x110] sm:$0xff]
        %v1046 = vld [vmem:[#allocation5 + $0x138] sm:$0xff]
        %v1047 = vld [vmem:[#allocation5 + $0x160] sm:$0xff]
        %v1048 = vld [vmem:[#allocation5 + $0x188] sm:$0xff]
        %v1049 = vld [vmem:[#allocation5 + $0x1b0] sm:$0xff]
        %v1050 = vld [vmem:[#allocation5 + $0x1d8] sm:$0xff]
        %v1051 = vld [vmem:[#allocation5 + $0x200] sm:$0xff]
        %v1052 = vld [vmem:[#allocation5 + $0x228] sm:$0xff]
        %v1053 = vld [vmem:[#allocation5 + $0x250] sm:$0xff]
        %v1054 = vld [vmem:[#allocation5 + $0x278] sm:$0xff]
        %1055 = vmatprep.subr.mxu0 0.0
        %1056 = vmatpush1.msra.mxu0 %v1054
        %1057 = vmatprep.subr.mxu0 0.0
        %1058 = vmatpush1.msra.mxu0 %v1053
        %1059 = vmatprep.subr.mxu0 0.0
        %1060 = vmatpush1.msra.mxu0 %v1052
        %1061 = vmatprep.subr.mxu0 0.0
        %1062 = vmatpush1.msra.mxu0 %v1051
        %1063 = vmatprep.subr.mxu0 0.0
        %1064 = vmatpush1.msra.mxu0 %v1050
        %1065 = vmatprep.subr.mxu0 0.0
        %1066 = vmatpush1.msra.mxu0 %v1049
        %1067 = vmatprep.subr.mxu0 0.0
        %1068 = vmatpush1.msra.mxu0 %v1048
        %1069 = vmatprep.subr.mxu0 0.0
        %1070 = vmatpush1.msra.mxu0 %v1047
        %1071 = vmatprep.subr.mxu0 0.0
        %1072 = vmatpush1.msra.mxu0 %v1046
        %1073 = vmatprep.subr.mxu0 0.0
        %1074 = vmatpush1.msra.mxu0 %v1045
        %1075 = vmatprep.subr.mxu0 0.0
        %1076 = vmatpush1.msra.mxu0 %v1044
        %1077 = vmatprep.subr.mxu0 0.0
        %1078 = vmatpush1.msra.mxu0 %v1043
        %1079 = vmatprep.subr.mxu0 0.0
        %1080 = vmatpush1.msra.mxu0 %v1042
        %1081 = vmatprep.subr.mxu0 0.0
        %1082 = vmatpush1.msra.mxu0 %v1041
        %1083 = vmatprep.subr.mxu0 0.0
        %1084 = vmatpush1.msra.mxu0 %v1040
        %1085 = vmatprep.subr.mxu0 0.0
        %1086 = vmatpush1.msra.mxu0 %v1039
        %1087 = vmatprep.subr.mxu0 0.0
        %1088 = vmatpush2.msra.mxu0 0.0
        %1089 = vmatprep.subr.mxu0 0.0
        %1090 = vmatpush2.msra.mxu0 0.0
        %1091 = vmatprep.subr.mxu0 0.0
        %1092 = vmatpush2.msra.mxu0 0.0
        %1093 = vmatprep.subr.mxu0 0.0
        %1094 = vmatpush2.msra.mxu0 0.0
        %1095 = vmatprep.subr.mxu0 0.0
        %1096 = vmatpush2.msra.mxu0 0.0
        %1097 = vmatprep.subr.mxu0 0.0
        %1098 = vmatpush2.msra.mxu0 0.0
        %1099 = vmatprep.subr.mxu0 0.0
        %1100 = vmatpush2.msra.mxu0 0.0
        %1101 = vmatprep.subr.mxu0 0.0
        %1102 = vmatpush2.msra.mxu0 0.0
        %1103 = vmatprep.subr.mxu0 0.0
        %1104 = vmatpush2.msra.mxu0 0.0
        %1105 = vmatprep.subr.mxu0 0.0
        %1106 = vmatpush2.msra.mxu0 0.0
        %1107 = vmatprep.subr.mxu0 0.0
        %1108 = vmatpush2.msra.mxu0 0.0
        %1109 = vmatprep.subr.mxu0 0.0
        %1110 = vmatpush2.msra.mxu0 0.0
        %1111 = vmatprep.subr.mxu0 0.0
        %1112 = vmatpush2.msra.mxu0 0.0
        %1113 = vmatprep.subr.mxu0 0.0
        %1114 = vmatpush2.msra.mxu0 0.0
        %1115 = vmatprep.subr.mxu0 0.0
        %1116 = vmatpush2.msra.mxu0 0.0
        %1117 = vmatprep.subr.mxu0 0.0
        %1118 = vmatpush2.msra.mxu0 0.0
        %1119 = vmatprep.mubr.f32.mxu0 0.0
        %1120 = vmatmul.mubr.f32.gmra.mxu0 %v220
        %v1121 = vpop.f32.mrf.mxu0
        %v1122 = vadd.f32 0.0, %v1121
        %v1123 = vpop.f32.mrf.mxu0
        %1124 = vmatprep.mubr.f32.mxu0 0.0
        %1125 = vmatmul.mubr.f32.gmra.mxu0 %v221
        %v1126 = vpop.f32.mrf.mxu0
        %v1127 = vadd.f32 0.0, %v1126
        %v1128 = vpop.f32.mrf.mxu0
        %1129 = vmatprep.mubr.f32.mxu0 0.0
        %1130 = vmatmul.mubr.f32.gmra.mxu0 %v222
        %v1131 = vpop.f32.mrf.mxu0
        %v1132 = vadd.f32 0.0, %v1131
        %v1133 = vpop.f32.mrf.mxu0
        %1134 = vmatprep.mubr.f32.mxu0 0.0
        %1135 = vmatmul.mubr.f32.gmra.mxu0 %v223
        %v1136 = vpop.f32.mrf.mxu0
        %v1137 = vadd.f32 0.0, %v1136
        %v1138 = vpop.f32.mrf.mxu0
        %1139 = vmatprep.mubr.f32.mxu0 0.0
        %1140 = vmatmul.mubr.f32.gmra.mxu0 %v224
        %v1141 = vpop.f32.mrf.mxu0
        %v1142 = vadd.f32 0.0, %v1141
        %v1143 = vpop.f32.mrf.mxu0
        %1144 = vmatprep.mubr.f32.mxu0 0.0
        %1145 = vmatmul.mubr.f32.gmra.mxu0 %v225
        %v1146 = vpop.f32.mrf.mxu0
        %v1147 = vadd.f32 0.0, %v1146
        %v1148 = vpop.f32.mrf.mxu0
        %1149 = vmatprep.mubr.f32.mxu0 0.0
        %1150 = vmatmul.mubr.f32.gmra.mxu0 %v226
        %v1151 = vpop.f32.mrf.mxu0
        %v1152 = vadd.f32 0.0, %v1151
        %v1153 = vpop.f32.mrf.mxu0
        %1154 = vmatprep.mubr.f32.mxu0 0.0
        %1155 = vmatmul.mubr.f32.gmra.mxu0 %v227
        %v1156 = vpop.f32.mrf.mxu0
        %v1157 = vadd.f32 0.0, %v1156
        %v1158 = vpop.f32.mrf.mxu0
        %1159 = vmatprep.mubr.f32.mxu0 0.0
        %1160 = vmatmul.mubr.f32.gmra.mxu0 %v228
        %v1161 = vpop.f32.mrf.mxu0
        %v1162 = vadd.f32 0.0, %v1161
        %v1163 = vpop.f32.mrf.mxu0
        %1164 = vmatprep.mubr.f32.mxu0 0.0
        %1165 = vmatmul.mubr.f32.gmra.mxu0 %v229
        %v1166 = vpop.f32.mrf.mxu0
        %v1167 = vadd.f32 0.0, %v1166
        %v1168 = vpop.f32.mrf.mxu0
        %1169 = vmatprep.mubr.f32.mxu0 0.0
        %1170 = vmatmul.mubr.f32.gmra.mxu0 %v230
        %v1171 = vpop.f32.mrf.mxu0
        %v1172 = vadd.f32 0.0, %v1171
        %v1173 = vpop.f32.mrf.mxu0
        %1174 = vmatprep.mubr.f32.mxu0 0.0
        %1175 = vmatmul.mubr.f32.gmra.mxu0 %v231
        %v1176 = vpop.f32.mrf.mxu0
        %v1177 = vadd.f32 0.0, %v1176
        %v1178 = vpop.f32.mrf.mxu0
        %1179 = vmatprep.mubr.f32.mxu0 0.0
        %1180 = vmatmul.mubr.f32.gmra.mxu0 %v232
        %v1181 = vpop.f32.mrf.mxu0
        %v1182 = vadd.f32 0.0, %v1181
        %v1183 = vpop.f32.mrf.mxu0
        %1184 = vmatprep.mubr.f32.mxu0 0.0
        %1185 = vmatmul.mubr.f32.gmra.mxu0 %v233
        %v1186 = vpop.f32.mrf.mxu0
        %v1187 = vadd.f32 0.0, %v1186
        %v1188 = vpop.f32.mrf.mxu0
        %1189 = vmatprep.mubr.f32.mxu0 0.0
        %1190 = vmatmul.mubr.f32.gmra.mxu0 %v234
        %v1191 = vpop.f32.mrf.mxu0
        %v1192 = vadd.f32 0.0, %v1191
        %v1193 = vpop.f32.mrf.mxu0
        %1194 = vmatprep.mubr.f32.mxu0 0.0
        %1195 = vmatmul.mubr.f32.gmra.mxu0 %v235
        %v1196 = vpop.f32.mrf.mxu0
        %v1197 = vadd.f32 0.0, %v1196
        %v1198 = vpop.f32.mrf.mxu0
        %1199 = vmatprep.mubr.f32.mxu0 0.0
        %1200 = vmatmul.mubr.f32.gmra.mxu0 %v236
        %v1201 = vpop.f32.mrf.mxu0
        %v1202 = vadd.f32 0.0, %v1201
        %v1203 = vpop.f32.mrf.mxu0
        %1204 = vmatprep.mubr.f32.mxu0 0.0
        %1205 = vmatmul.mubr.f32.gmra.mxu0 %v237
        %v1206 = vpop.f32.mrf.mxu0
        %v1207 = vadd.f32 0.0, %v1206
        %v1208 = vpop.f32.mrf.mxu0
        %1209 = vmatprep.mubr.f32.mxu0 0.0
        %1210 = vmatmul.mubr.f32.gmra.mxu0 %v238
        %v1211 = vpop.f32.mrf.mxu0
        %v1212 = vadd.f32 0.0, %v1211
        %v1213 = vpop.f32.mrf.mxu0
        %1214 = vmatprep.mubr.f32.mxu0 0.0
        %1215 = vmatmul.mubr.f32.gmra.mxu0 %v239
        %v1216 = vpop.f32.mrf.mxu0
        %v1217 = vadd.f32 0.0, %v1216
        %v1218 = vpop.f32.mrf.mxu0
        %1219 = vmatprep.mubr.f32.mxu0 0.0
        %1220 = vmatmul.mubr.f32.gmra.mxu0 %v240
        %v1221 = vpop.f32.mrf.mxu0
        %v1222 = vadd.f32 0.0, %v1221
        %v1223 = vpop.f32.mrf.mxu0
        %1224 = vmatprep.mubr.f32.mxu0 0.0
        %1225 = vmatmul.mubr.f32.gmra.mxu0 %v241
        %v1226 = vpop.f32.mrf.mxu0
        %v1227 = vadd.f32 0.0, %v1226
        %v1228 = vpop.f32.mrf.mxu0
        %1229 = vmatprep.mubr.f32.mxu0 0.0
        %1230 = vmatmul.mubr.f32.gmra.mxu0 %v242
        %v1231 = vpop.f32.mrf.mxu0
        %v1232 = vadd.f32 0.0, %v1231
        %v1233 = vpop.f32.mrf.mxu0
        %1234 = vmatprep.mubr.f32.mxu0 0.0
        %1235 = vmatmul.mubr.f32.gmra.mxu0 %v243
        %v1236 = vpop.f32.mrf.mxu0
        %v1237 = vadd.f32 0.0, %v1236
        %v1238 = vpop.f32.mrf.mxu0
        %1239 = vmatprep.mubr.f32.mxu0 0.0
        %1240 = vmatmul.mubr.f32.gmra.mxu0 %v244
        %v1241 = vpop.f32.mrf.mxu0
        %v1242 = vadd.f32 0.0, %v1241
        %v1243 = vpop.f32.mrf.mxu0
        %1244 = vmatprep.mubr.f32.mxu0 0.0
        %1245 = vmatmul.mubr.f32.gmra.mxu0 %v245
        %v1246 = vpop.f32.mrf.mxu0
        %v1247 = vadd.f32 0.0, %v1246
        %v1248 = vpop.f32.mrf.mxu0
        %1249 = vmatprep.mubr.f32.mxu0 0.0
        %1250 = vmatmul.mubr.f32.gmra.mxu0 %v246
        %v1251 = vpop.f32.mrf.mxu0
        %v1252 = vadd.f32 0.0, %v1251
        %v1253 = vpop.f32.mrf.mxu0
        %1254 = vmatprep.mubr.f32.mxu0 0.0
        %1255 = vmatmul.mubr.f32.gmra.mxu0 %v247
        %v1256 = vpop.f32.mrf.mxu0
        %v1257 = vadd.f32 0.0, %v1256
        %v1258 = vpop.f32.mrf.mxu0
        %1259 = vmatprep.mubr.f32.mxu0 0.0
        %1260 = vmatmul.mubr.f32.gmra.mxu0 %v248
        %v1261 = vpop.f32.mrf.mxu0
        %v1262 = vadd.f32 0.0, %v1261
        %v1263 = vpop.f32.mrf.mxu0
        %1264 = vmatprep.mubr.f32.mxu0 0.0
        %1265 = vmatmul.mubr.f32.gmra.mxu0 %v249
        %v1266 = vpop.f32.mrf.mxu0
        %v1267 = vadd.f32 0.0, %v1266
        %v1268 = vpop.f32.mrf.mxu0
        %1269 = vmatprep.mubr.f32.mxu0 0.0
        %1270 = vmatmul.mubr.f32.gmra.mxu0 %v250
        %v1271 = vpop.f32.mrf.mxu0
        %v1272 = vadd.f32 0.0, %v1271
        %v1273 = vpop.f32.mrf.mxu0
        %1274 = vmatprep.mubr.f32.mxu0 0.0
        %1275 = vmatmul.mubr.f32.gmra.mxu0 %v251
        %v1276 = vpop.f32.mrf.mxu0
        %v1277 = vadd.f32 0.0, %v1276
        %v1278 = vpop.f32.mrf.mxu0
        %1279 = vdwg.mxu0
        %v1280 = vmul.f32 %v1122, %v881
        %v1281 = vmul.f32 %v1127, %v886
        %v1282 = vmul.f32 %v1132, %v891
        %v1283 = vmul.f32 %v1137, %v896
        %v1284 = vmul.f32 %v1142, %v901
        %v1285 = vmul.f32 %v1147, %v906
        %v1286 = vmul.f32 %v1152, %v911
        %v1287 = vmul.f32 %v1157, %v916
        %v1288 = vmul.f32 %v1162, %v921
        %v1289 = vmul.f32 %v1167, %v926
        %v1290 = vmul.f32 %v1172, %v931
        %v1291 = vmul.f32 %v1177, %v936
        %v1292 = vmul.f32 %v1182, %v941
        %v1293 = vmul.f32 %v1187, %v946
        %v1294 = vmul.f32 %v1192, %v951
        %v1295 = vmul.f32 %v1197, %v956
        %v1296 = vmul.f32 %v1202, %v961
        %v1297 = vmul.f32 %v1207, %v966
        %v1298 = vmul.f32 %v1212, %v971
        %v1299 = vmul.f32 %v1217, %v976
        %v1300 = vmul.f32 %v1222, %v981
        %v1301 = vmul.f32 %v1227, %v986
        %v1302 = vmul.f32 %v1232, %v991
        %v1303 = vmul.f32 %v1237, %v996
        %v1304 = vmul.f32 %v1242, %v1001
        %v1305 = vmul.f32 %v1247, %v1006
        %v1306 = vmul.f32 %v1252, %v1011
        %v1307 = vmul.f32 %v1257, %v1016
        %v1308 = vmul.f32 %v1262, %v1021
        %v1309 = vmul.f32 %v1267, %v1026
        %v1310 = vmul.f32 %v1272, %v1031
        %v1311 = vmul.f32 %v1277, %v1036
        %v1312 = vadd.f32 %v766, %v1280
        %v1313 = vadd.f32 %v767, %v1281
        %v1314 = vadd.f32 %v768, %v1282
        %v1315 = vadd.f32 %v769, %v1283
        %v1316 = vadd.f32 %v770, %v1284
        %v1317 = vadd.f32 %v771, %v1285
        %v1318 = vadd.f32 %v772, %v1286
        %v1319 = vadd.f32 %v773, %v1287
        %v1320 = vadd.f32 %v774, %v1288
        %v1321 = vadd.f32 %v775, %v1289
        %v1322 = vadd.f32 %v776, %v1290
        %v1323 = vadd.f32 %v777, %v1291
        %v1324 = vadd.f32 %v778, %v1292
        %v1325 = vadd.f32 %v779, %v1293
        %v1326 = vadd.f32 %v780, %v1294
        %v1327 = vadd.f32 %v781, %v1295
        %v1328 = vadd.f32 %v782, %v1296
        %v1329 = vadd.f32 %v783, %v1297
        %v1330 = vadd.f32 %v784, %v1298
        %v1331 = vadd.f32 %v785, %v1299
        %v1332 = vadd.f32 %v786, %v1300
        %v1333 = vadd.f32 %v787, %v1301
        %v1334 = vadd.f32 %v788, %v1302
        %v1335 = vadd.f32 %v789, %v1303
        %v1336 = vadd.f32 %v790, %v1304
        %v1337 = vadd.f32 %v791, %v1305
        %v1338 = vadd.f32 %v792, %v1306
        %v1339 = vadd.f32 %v793, %v1307
        %v1340 = vadd.f32 %v794, %v1308
        %v1341 = vadd.f32 %v795, %v1309
        %v1342 = vadd.f32 %v796, %v1310
        %v1343 = vadd.f32 %v797, %v1311
        %1344 = vmatprep.subr.mxu0 0.0
        %1345 = vmatpush1.msra.mxu0 %v267
        %1346 = vmatprep.subr.mxu0 0.0
        %1347 = vmatpush1.msra.mxu0 %v266
        %1348 = vmatprep.subr.mxu0 0.0
        %1349 = vmatpush1.msra.mxu0 %v265
        %1350 = vmatprep.subr.mxu0 0.0
        %1351 = vmatpush1.msra.mxu0 %v264
        %1352 = vmatprep.subr.mxu0 0.0
        %1353 = vmatpush1.msra.mxu0 %v263
        %1354 = vmatprep.subr.mxu0 0.0
        %1355 = vmatpush1.msra.mxu0 %v262
        %1356 = vmatprep.subr.mxu0 0.0
        %1357 = vmatpush1.msra.mxu0 %v261
        %1358 = vmatprep.subr.mxu0 0.0
        %1359 = vmatpush1.msra.mxu0 %v260
        %1360 = vmatprep.subr.mxu0 0.0
        %1361 = vmatpush1.msra.mxu0 %v259
        %1362 = vmatprep.subr.mxu0 0.0
        %1363 = vmatpush1.msra.mxu0 %v258
        %1364 = vmatprep.subr.mxu0 0.0
        %1365 = vmatpush1.msra.mxu0 %v257
        %1366 = vmatprep.subr.mxu0 0.0
        %1367 = vmatpush1.msra.mxu0 %v256
        %1368 = vmatprep.subr.mxu0 0.0
        %1369 = vmatpush1.msra.mxu0 %v255
        %1370 = vmatprep.subr.mxu0 0.0
        %1371 = vmatpush1.msra.mxu0 %v254
        %1372 = vmatprep.subr.mxu0 0.0
        %1373 = vmatpush1.msra.mxu0 %v253
        %1374 = vmatprep.subr.mxu0 0.0
        %1375 = vmatpush1.msra.mxu0 %v252
        %1376 = vmatprep.subr.mxu0 0.0
        %1377 = vmatpush2.msra.mxu0 0.0
        %1378 = vmatprep.subr.mxu0 0.0
        %1379 = vmatpush2.msra.mxu0 0.0
        %1380 = vmatprep.subr.mxu0 0.0
        %1381 = vmatpush2.msra.mxu0 0.0
        %1382 = vmatprep.subr.mxu0 0.0
        %1383 = vmatpush2.msra.mxu0 0.0
        %1384 = vmatprep.subr.mxu0 0.0
        %1385 = vmatpush2.msra.mxu0 0.0
        %1386 = vmatprep.subr.mxu0 0.0
        %1387 = vmatpush2.msra.mxu0 0.0
        %1388 = vmatprep.subr.mxu0 0.0
        %1389 = vmatpush2.msra.mxu0 0.0
        %1390 = vmatprep.subr.mxu0 0.0
        %1391 = vmatpush2.msra.mxu0 0.0
        %1392 = vmatprep.subr.mxu0 0.0
        %1393 = vmatpush2.msra.mxu0 0.0
        %1394 = vmatprep.subr.mxu0 0.0
        %1395 = vmatpush2.msra.mxu0 0.0
        %1396 = vmatprep.subr.mxu0 0.0
        %1397 = vmatpush2.msra.mxu0 0.0
        %1398 = vmatprep.subr.mxu0 0.0
        %1399 = vmatpush2.msra.mxu0 0.0
        %1400 = vmatprep.subr.mxu0 0.0
        %1401 = vmatpush2.msra.mxu0 0.0
        %1402 = vmatprep.subr.mxu0 0.0
        %1403 = vmatpush2.msra.mxu0 0.0
        %1404 = vmatprep.subr.mxu0 0.0
        %1405 = vmatpush2.msra.mxu0 0.0
        %1406 = vmatprep.subr.mxu0 0.0
        %1407 = vmatpush2.msra.mxu0 0.0
        %1408 = vmatprep.mubr.f32.mxu0 0.0
        %1409 = vmatmul.mubr.f32.gmra.mxu0 %v1312
        %v1410 = vpop.f32.mrf.mxu0
        %v1411 = vadd.f32 0.0, %v1410
        %v1412 = vpop.f32.mrf.mxu0
        %1413 = vmatprep.mubr.f32.mxu0 0.0
        %1414 = vmatmul.mubr.f32.gmra.mxu0 %v1313
        %v1415 = vpop.f32.mrf.mxu0
        %v1416 = vadd.f32 0.0, %v1415
        %v1417 = vpop.f32.mrf.mxu0
        %1418 = vmatprep.mubr.f32.mxu0 0.0
        %1419 = vmatmul.mubr.f32.gmra.mxu0 %v1314
        %v1420 = vpop.f32.mrf.mxu0
        %v1421 = vadd.f32 0.0, %v1420
        %v1422 = vpop.f32.mrf.mxu0
        %1423 = vmatprep.mubr.f32.mxu0 0.0
        %1424 = vmatmul.mubr.f32.gmra.mxu0 %v1315
        %v1425 = vpop.f32.mrf.mxu0
        %v1426 = vadd.f32 0.0, %v1425
        %v1427 = vpop.f32.mrf.mxu0
        %1428 = vmatprep.mubr.f32.mxu0 0.0
        %1429 = vmatmul.mubr.f32.gmra.mxu0 %v1316
        %v1430 = vpop.f32.mrf.mxu0
        %v1431 = vadd.f32 0.0, %v1430
        %v1432 = vpop.f32.mrf.mxu0
        %1433 = vmatprep.mubr.f32.mxu0 0.0
        %1434 = vmatmul.mubr.f32.gmra.mxu0 %v1317
        %v1435 = vpop.f32.mrf.mxu0
        %v1436 = vadd.f32 0.0, %v1435
        %v1437 = vpop.f32.mrf.mxu0
        %1438 = vmatprep.mubr.f32.mxu0 0.0
        %1439 = vmatmul.mubr.f32.gmra.mxu0 %v1318
        %v1440 = vpop.f32.mrf.mxu0
        %v1441 = vadd.f32 0.0, %v1440
        %v1442 = vpop.f32.mrf.mxu0
        %1443 = vmatprep.mubr.f32.mxu0 0.0
        %1444 = vmatmul.mubr.f32.gmra.mxu0 %v1319
        %v1445 = vpop.f32.mrf.mxu0
        %v1446 = vadd.f32 0.0, %v1445
        %v1447 = vpop.f32.mrf.mxu0
        %1448 = vmatprep.mubr.f32.mxu0 0.0
        %1449 = vmatmul.mubr.f32.gmra.mxu0 %v1320
        %v1450 = vpop.f32.mrf.mxu0
        %v1451 = vadd.f32 0.0, %v1450
        %v1452 = vpop.f32.mrf.mxu0
        %1453 = vmatprep.mubr.f32.mxu0 0.0
        %1454 = vmatmul.mubr.f32.gmra.mxu0 %v1321
        %v1455 = vpop.f32.mrf.mxu0
        %v1456 = vadd.f32 0.0, %v1455
        %v1457 = vpop.f32.mrf.mxu0
        %1458 = vmatprep.mubr.f32.mxu0 0.0
        %1459 = vmatmul.mubr.f32.gmra.mxu0 %v1322
        %v1460 = vpop.f32.mrf.mxu0
        %v1461 = vadd.f32 0.0, %v1460
        %v1462 = vpop.f32.mrf.mxu0
        %1463 = vmatprep.mubr.f32.mxu0 0.0
        %1464 = vmatmul.mubr.f32.gmra.mxu0 %v1323
        %v1465 = vpop.f32.mrf.mxu0
        %v1466 = vadd.f32 0.0, %v1465
        %v1467 = vpop.f32.mrf.mxu0
        %1468 = vmatprep.mubr.f32.mxu0 0.0
        %1469 = vmatmul.mubr.f32.gmra.mxu0 %v1324
        %v1470 = vpop.f32.mrf.mxu0
        %v1471 = vadd.f32 0.0, %v1470
        %v1472 = vpop.f32.mrf.mxu0
        %1473 = vmatprep.mubr.f32.mxu0 0.0
        %1474 = vmatmul.mubr.f32.gmra.mxu0 %v1325
        %v1475 = vpop.f32.mrf.mxu0
        %v1476 = vadd.f32 0.0, %v1475
        %v1477 = vpop.f32.mrf.mxu0
        %1478 = vmatprep.mubr.f32.mxu0 0.0
        %1479 = vmatmul.mubr.f32.gmra.mxu0 %v1326
        %v1480 = vpop.f32.mrf.mxu0
        %v1481 = vadd.f32 0.0, %v1480
        %v1482 = vpop.f32.mrf.mxu0
        %1483 = vmatprep.mubr.f32.mxu0 0.0
        %1484 = vmatmul.mubr.f32.gmra.mxu0 %v1327
        %v1485 = vpop.f32.mrf.mxu0
        %v1486 = vadd.f32 0.0, %v1485
        %v1487 = vpop.f32.mrf.mxu0
        %1488 = vmatprep.mubr.f32.mxu0 0.0
        %1489 = vmatmul.mubr.f32.gmra.mxu0 %v1328
        %v1490 = vpop.f32.mrf.mxu0
        %v1491 = vadd.f32 0.0, %v1490
        %v1492 = vpop.f32.mrf.mxu0
        %1493 = vmatprep.mubr.f32.mxu0 0.0
        %1494 = vmatmul.mubr.f32.gmra.mxu0 %v1329
        %v1495 = vpop.f32.mrf.mxu0
        %v1496 = vadd.f32 0.0, %v1495
        %v1497 = vpop.f32.mrf.mxu0
        %1498 = vmatprep.mubr.f32.mxu0 0.0
        %1499 = vmatmul.mubr.f32.gmra.mxu0 %v1330
        %v1500 = vpop.f32.mrf.mxu0
        %v1501 = vadd.f32 0.0, %v1500
        %v1502 = vpop.f32.mrf.mxu0
        %1503 = vmatprep.mubr.f32.mxu0 0.0
        %1504 = vmatmul.mubr.f32.gmra.mxu0 %v1331
        %v1505 = vpop.f32.mrf.mxu0
        %v1506 = vadd.f32 0.0, %v1505
        %v1507 = vpop.f32.mrf.mxu0
        %1508 = vmatprep.mubr.f32.mxu0 0.0
        %1509 = vmatmul.mubr.f32.gmra.mxu0 %v1332
        %v1510 = vpop.f32.mrf.mxu0
        %v1511 = vadd.f32 0.0, %v1510
        %v1512 = vpop.f32.mrf.mxu0
        %1513 = vmatprep.mubr.f32.mxu0 0.0
        %1514 = vmatmul.mubr.f32.gmra.mxu0 %v1333
        %v1515 = vpop.f32.mrf.mxu0
        %v1516 = vadd.f32 0.0, %v1515
        %v1517 = vpop.f32.mrf.mxu0
        %1518 = vmatprep.mubr.f32.mxu0 0.0
        %1519 = vmatmul.mubr.f32.gmra.mxu0 %v1334
        %v1520 = vpop.f32.mrf.mxu0
        %v1521 = vadd.f32 0.0, %v1520
        %v1522 = vpop.f32.mrf.mxu0
        %1523 = vmatprep.mubr.f32.mxu0 0.0
        %1524 = vmatmul.mubr.f32.gmra.mxu0 %v1335
        %v1525 = vpop.f32.mrf.mxu0
        %v1526 = vadd.f32 0.0, %v1525
        %v1527 = vpop.f32.mrf.mxu0
        %1528 = vmatprep.mubr.f32.mxu0 0.0
        %1529 = vmatmul.mubr.f32.gmra.mxu0 %v1336
        %v1530 = vpop.f32.mrf.mxu0
        %v1531 = vadd.f32 0.0, %v1530
        %v1532 = vpop.f32.mrf.mxu0
        %1533 = vmatprep.mubr.f32.mxu0 0.0
        %1534 = vmatmul.mubr.f32.gmra.mxu0 %v1337
        %v1535 = vpop.f32.mrf.mxu0
        %v1536 = vadd.f32 0.0, %v1535
        %v1537 = vpop.f32.mrf.mxu0
        %1538 = vmatprep.mubr.f32.mxu0 0.0
        %1539 = vmatmul.mubr.f32.gmra.mxu0 %v1338
        %v1540 = vpop.f32.mrf.mxu0
        %v1541 = vadd.f32 0.0, %v1540
        %v1542 = vpop.f32.mrf.mxu0
        %1543 = vmatprep.mubr.f32.mxu0 0.0
        %1544 = vmatmul.mubr.f32.gmra.mxu0 %v1339
        %v1545 = vpop.f32.mrf.mxu0
        %v1546 = vadd.f32 0.0, %v1545
        %v1547 = vpop.f32.mrf.mxu0
        %1548 = vmatprep.mubr.f32.mxu0 0.0
        %1549 = vmatmul.mubr.f32.gmra.mxu0 %v1340
        %v1550 = vpop.f32.mrf.mxu0
        %v1551 = vadd.f32 0.0, %v1550
        %v1552 = vpop.f32.mrf.mxu0
        %1553 = vmatprep.mubr.f32.mxu0 0.0
        %1554 = vmatmul.mubr.f32.gmra.mxu0 %v1341
        %v1555 = vpop.f32.mrf.mxu0
        %v1556 = vadd.f32 0.0, %v1555
        %v1557 = vpop.f32.mrf.mxu0
        %1558 = vmatprep.mubr.f32.mxu0 0.0
        %1559 = vmatmul.mubr.f32.gmra.mxu0 %v1342
        %v1560 = vpop.f32.mrf.mxu0
        %v1561 = vadd.f32 0.0, %v1560
        %v1562 = vpop.f32.mrf.mxu0
        %1563 = vmatprep.mubr.f32.mxu0 0.0
        %1564 = vmatmul.mubr.f32.gmra.mxu0 %v1343
        %v1565 = vpop.f32.mrf.mxu0
        %v1566 = vadd.f32 0.0, %v1565
        %v1567 = vpop.f32.mrf.mxu0
        %1568 = vdwg.mxu0
        %1569 = vmatprep.subr.mxu0 0.0
        %1570 = vmatpush1.msra.mxu0 %v283
        %1571 = vmatprep.subr.mxu0 0.0
        %1572 = vmatpush1.msra.mxu0 %v282
        %1573 = vmatprep.subr.mxu0 0.0
        %1574 = vmatpush1.msra.mxu0 %v281
        %1575 = vmatprep.subr.mxu0 0.0
        %1576 = vmatpush1.msra.mxu0 %v280
        %1577 = vmatprep.subr.mxu0 0.0
        %1578 = vmatpush1.msra.mxu0 %v279
        %1579 = vmatprep.subr.mxu0 0.0
        %1580 = vmatpush1.msra.mxu0 %v278
        %1581 = vmatprep.subr.mxu0 0.0
        %1582 = vmatpush1.msra.mxu0 %v277
        %1583 = vmatprep.subr.mxu0 0.0
        %1584 = vmatpush1.msra.mxu0 %v276
        %1585 = vmatprep.subr.mxu0 0.0
        %1586 = vmatpush1.msra.mxu0 %v275
        %1587 = vmatprep.subr.mxu0 0.0
        %1588 = vmatpush1.msra.mxu0 %v274
        %1589 = vmatprep.subr.mxu0 0.0
        %1590 = vmatpush1.msra.mxu0 %v273
        %1591 = vmatprep.subr.mxu0 0.0
        %1592 = vmatpush1.msra.mxu0 %v272
        %1593 = vmatprep.subr.mxu0 0.0
        %1594 = vmatpush1.msra.mxu0 %v271
        %1595 = vmatprep.subr.mxu0 0.0
        %1596 = vmatpush1.msra.mxu0 %v270
        %1597 = vmatprep.subr.mxu0 0.0
        %1598 = vmatpush1.msra.mxu0 %v269
        %1599 = vmatprep.subr.mxu0 0.0
        %1600 = vmatpush1.msra.mxu0 %v268
        %1601 = vmatprep.subr.mxu0 0.0
        %1602 = vmatpush2.msra.mxu0 0.0
        %1603 = vmatprep.subr.mxu0 0.0
        %1604 = vmatpush2.msra.mxu0 0.0
        %1605 = vmatprep.subr.mxu0 0.0
        %1606 = vmatpush2.msra.mxu0 0.0
        %1607 = vmatprep.subr.mxu0 0.0
        %1608 = vmatpush2.msra.mxu0 0.0
        %1609 = vmatprep.subr.mxu0 0.0
        %1610 = vmatpush2.msra.mxu0 0.0
        %1611 = vmatprep.subr.mxu0 0.0
        %1612 = vmatpush2.msra.mxu0 0.0
        %1613 = vmatprep.subr.mxu0 0.0
        %1614 = vmatpush2.msra.mxu0 0.0
        %1615 = vmatprep.subr.mxu0 0.0
        %1616 = vmatpush2.msra.mxu0 0.0
        %1617 = vmatprep.subr.mxu0 0.0
        %1618 = vmatpush2.msra.mxu0 0.0
        %1619 = vmatprep.subr.mxu0 0.0
        %1620 = vmatpush2.msra.mxu0 0.0
        %1621 = vmatprep.subr.mxu0 0.0
        %1622 = vmatpush2.msra.mxu0 0.0
        %1623 = vmatprep.subr.mxu0 0.0
        %1624 = vmatpush2.msra.mxu0 0.0
        %1625 = vmatprep.subr.mxu0 0.0
        %1626 = vmatpush2.msra.mxu0 0.0
        %1627 = vmatprep.subr.mxu0 0.0
        %1628 = vmatpush2.msra.mxu0 0.0
        %1629 = vmatprep.subr.mxu0 0.0
        %1630 = vmatpush2.msra.mxu0 0.0
        %1631 = vmatprep.subr.mxu0 0.0
        %1632 = vmatpush2.msra.mxu0 0.0
        %1633 = vmatprep.mubr.f32.mxu0 0.0
        %1634 = vmatmul.mubr.f32.gmra.mxu0 %v220
        %v1635 = vpop.f32.mrf.mxu0
        %v1636 = vadd.f32 %v1411, %v1635
        %v1637 = vpop.f32.mrf.mxu0
        %1638 = vmatprep.mubr.f32.mxu0 0.0
        %1639 = vmatmul.mubr.f32.gmra.mxu0 %v221
        %v1640 = vpop.f32.mrf.mxu0
        %v1641 = vadd.f32 %v1416, %v1640
        %v1642 = vpop.f32.mrf.mxu0
        %1643 = vmatprep.mubr.f32.mxu0 0.0
        %1644 = vmatmul.mubr.f32.gmra.mxu0 %v222
        %v1645 = vpop.f32.mrf.mxu0
        %v1646 = vadd.f32 %v1421, %v1645
        %v1647 = vpop.f32.mrf.mxu0
        %1648 = vmatprep.mubr.f32.mxu0 0.0
        %1649 = vmatmul.mubr.f32.gmra.mxu0 %v223
        %v1650 = vpop.f32.mrf.mxu0
        %v1651 = vadd.f32 %v1426, %v1650
        %v1652 = vpop.f32.mrf.mxu0
        %1653 = vmatprep.mubr.f32.mxu0 0.0
        %1654 = vmatmul.mubr.f32.gmra.mxu0 %v224
        %v1655 = vpop.f32.mrf.mxu0
        %v1656 = vadd.f32 %v1431, %v1655
        %v1657 = vpop.f32.mrf.mxu0
        %1658 = vmatprep.mubr.f32.mxu0 0.0
        %1659 = vmatmul.mubr.f32.gmra.mxu0 %v225
        %v1660 = vpop.f32.mrf.mxu0
        %v1661 = vadd.f32 %v1436, %v1660
        %v1662 = vpop.f32.mrf.mxu0
        %1663 = vmatprep.mubr.f32.mxu0 0.0
        %1664 = vmatmul.mubr.f32.gmra.mxu0 %v226
        %v1665 = vpop.f32.mrf.mxu0
        %v1666 = vadd.f32 %v1441, %v1665
        %v1667 = vpop.f32.mrf.mxu0
        %1668 = vmatprep.mubr.f32.mxu0 0.0
        %1669 = vmatmul.mubr.f32.gmra.mxu0 %v227
        %v1670 = vpop.f32.mrf.mxu0
        %v1671 = vadd.f32 %v1446, %v1670
        %v1672 = vpop.f32.mrf.mxu0
        %1673 = vmatprep.mubr.f32.mxu0 0.0
        %1674 = vmatmul.mubr.f32.gmra.mxu0 %v228
        %v1675 = vpop.f32.mrf.mxu0
        %v1676 = vadd.f32 %v1451, %v1675
        %v1677 = vpop.f32.mrf.mxu0
        %1678 = vmatprep.mubr.f32.mxu0 0.0
        %1679 = vmatmul.mubr.f32.gmra.mxu0 %v229
        %v1680 = vpop.f32.mrf.mxu0
        %v1681 = vadd.f32 %v1456, %v1680
        %v1682 = vpop.f32.mrf.mxu0
        %1683 = vmatprep.mubr.f32.mxu0 0.0
        %1684 = vmatmul.mubr.f32.gmra.mxu0 %v230
        %v1685 = vpop.f32.mrf.mxu0
        %v1686 = vadd.f32 %v1461, %v1685
        %v1687 = vpop.f32.mrf.mxu0
        %1688 = vmatprep.mubr.f32.mxu0 0.0
        %1689 = vmatmul.mubr.f32.gmra.mxu0 %v231
        %v1690 = vpop.f32.mrf.mxu0
        %v1691 = vadd.f32 %v1466, %v1690
        %v1692 = vpop.f32.mrf.mxu0
        %1693 = vmatprep.mubr.f32.mxu0 0.0
        %1694 = vmatmul.mubr.f32.gmra.mxu0 %v232
        %v1695 = vpop.f32.mrf.mxu0
        %v1696 = vadd.f32 %v1471, %v1695
        %v1697 = vpop.f32.mrf.mxu0
        %1698 = vmatprep.mubr.f32.mxu0 0.0
        %1699 = vmatmul.mubr.f32.gmra.mxu0 %v233
        %v1700 = vpop.f32.mrf.mxu0
        %v1701 = vadd.f32 %v1476, %v1700
        %v1702 = vpop.f32.mrf.mxu0
        %1703 = vmatprep.mubr.f32.mxu0 0.0
        %1704 = vmatmul.mubr.f32.gmra.mxu0 %v234
        %v1705 = vpop.f32.mrf.mxu0
        %v1706 = vadd.f32 %v1481, %v1705
        %v1707 = vpop.f32.mrf.mxu0
        %1708 = vmatprep.mubr.f32.mxu0 0.0
        %1709 = vmatmul.mubr.f32.gmra.mxu0 %v235
        %v1710 = vpop.f32.mrf.mxu0
        %v1711 = vadd.f32 %v1486, %v1710
        %v1712 = vpop.f32.mrf.mxu0
        %1713 = vmatprep.mubr.f32.mxu0 0.0
        %1714 = vmatmul.mubr.f32.gmra.mxu0 %v236
        %v1715 = vpop.f32.mrf.mxu0
        %v1716 = vadd.f32 %v1491, %v1715
        %v1717 = vpop.f32.mrf.mxu0
        %1718 = vmatprep.mubr.f32.mxu0 0.0
        %1719 = vmatmul.mubr.f32.gmra.mxu0 %v237
        %v1720 = vpop.f32.mrf.mxu0
        %v1721 = vadd.f32 %v1496, %v1720
        %v1722 = vpop.f32.mrf.mxu0
        %1723 = vmatprep.mubr.f32.mxu0 0.0
        %1724 = vmatmul.mubr.f32.gmra.mxu0 %v238
        %v1725 = vpop.f32.mrf.mxu0
        %v1726 = vadd.f32 %v1501, %v1725
        %v1727 = vpop.f32.mrf.mxu0
        %1728 = vmatprep.mubr.f32.mxu0 0.0
        %1729 = vmatmul.mubr.f32.gmra.mxu0 %v239
        %v1730 = vpop.f32.mrf.mxu0
        %v1731 = vadd.f32 %v1506, %v1730
        %v1732 = vpop.f32.mrf.mxu0
        %1733 = vmatprep.mubr.f32.mxu0 0.0
        %1734 = vmatmul.mubr.f32.gmra.mxu0 %v240
        %v1735 = vpop.f32.mrf.mxu0
        %v1736 = vadd.f32 %v1511, %v1735
        %v1737 = vpop.f32.mrf.mxu0
        %1738 = vmatprep.mubr.f32.mxu0 0.0
        %1739 = vmatmul.mubr.f32.gmra.mxu0 %v241
        %v1740 = vpop.f32.mrf.mxu0
        %v1741 = vadd.f32 %v1516, %v1740
        %v1742 = vpop.f32.mrf.mxu0
        %1743 = vmatprep.mubr.f32.mxu0 0.0
        %1744 = vmatmul.mubr.f32.gmra.mxu0 %v242
        %v1745 = vpop.f32.mrf.mxu0
        %v1746 = vadd.f32 %v1521, %v1745
        %v1747 = vpop.f32.mrf.mxu0
        %1748 = vmatprep.mubr.f32.mxu0 0.0
        %1749 = vmatmul.mubr.f32.gmra.mxu0 %v243
        %v1750 = vpop.f32.mrf.mxu0
        %v1751 = vadd.f32 %v1526, %v1750
        %v1752 = vpop.f32.mrf.mxu0
        %1753 = vmatprep.mubr.f32.mxu0 0.0
        %1754 = vmatmul.mubr.f32.gmra.mxu0 %v244
        %v1755 = vpop.f32.mrf.mxu0
        %v1756 = vadd.f32 %v1531, %v1755
        %v1757 = vpop.f32.mrf.mxu0
        %1758 = vmatprep.mubr.f32.mxu0 0.0
        %1759 = vmatmul.mubr.f32.gmra.mxu0 %v245
        %v1760 = vpop.f32.mrf.mxu0
        %v1761 = vadd.f32 %v1536, %v1760
        %v1762 = vpop.f32.mrf.mxu0
        %1763 = vmatprep.mubr.f32.mxu0 0.0
        %1764 = vmatmul.mubr.f32.gmra.mxu0 %v246
        %v1765 = vpop.f32.mrf.mxu0
        %v1766 = vadd.f32 %v1541, %v1765
        %v1767 = vpop.f32.mrf.mxu0
        %1768 = vmatprep.mubr.f32.mxu0 0.0
        %1769 = vmatmul.mubr.f32.gmra.mxu0 %v247
        %v1770 = vpop.f32.mrf.mxu0
        %v1771 = vadd.f32 %v1546, %v1770
        %v1772 = vpop.f32.mrf.mxu0
        %1773 = vmatprep.mubr.f32.mxu0 0.0
        %1774 = vmatmul.mubr.f32.gmra.mxu0 %v248
        %v1775 = vpop.f32.mrf.mxu0
        %v1776 = vadd.f32 %v1551, %v1775
        %v1777 = vpop.f32.mrf.mxu0
        %1778 = vmatprep.mubr.f32.mxu0 0.0
        %1779 = vmatmul.mubr.f32.gmra.mxu0 %v249
        %v1780 = vpop.f32.mrf.mxu0
        %v1781 = vadd.f32 %v1556, %v1780
        %v1782 = vpop.f32.mrf.mxu0
        %1783 = vmatprep.mubr.f32.mxu0 0.0
        %1784 = vmatmul.mubr.f32.gmra.mxu0 %v250
        %v1785 = vpop.f32.mrf.mxu0
        %v1786 = vadd.f32 %v1561, %v1785
        %v1787 = vpop.f32.mrf.mxu0
        %1788 = vmatprep.mubr.f32.mxu0 0.0
        %1789 = vmatmul.mubr.f32.gmra.mxu0 %v251
        %v1790 = vpop.f32.mrf.mxu0
        %v1791 = vadd.f32 %v1566, %v1790
        %v1792 = vpop.f32.mrf.mxu0
        %1793 = vdwg.mxu0
        %1794 = vst [vmem:[%s217] sm:$0xff] %v1636
        %1795 = vst [vmem:[%s217 + $0x8] sm:$0xff] %v1641
        %1796 = vst [vmem:[%s217 + $0x10] sm:$0xff] %v1646
        %1797 = vst [vmem:[%s217 + $0x18] sm:$0xff] %v1651
        %1798 = vst [vmem:[%s217 + $0x20] sm:$0xff] %v1656
        %1799 = vst [vmem:[%s217 + $0x28] sm:$0xff] %v1661
        %1800 = vst [vmem:[%s217 + $0x30] sm:$0xff] %v1666
        %1801 = vst [vmem:[%s217 + $0x38] sm:$0xff] %v1671
        %1802 = vst [vmem:[%s217 + $0x40] sm:$0xff] %v1676
        %1803 = vst [vmem:[%s217 + $0x48] sm:$0xff] %v1681
        %1804 = vst [vmem:[%s217 + $0x50] sm:$0xff] %v1686
        %1805 = vst [vmem:[%s217 + $0x58] sm:$0xff] %v1691
        %1806 = vst [vmem:[%s217 + $0x60] sm:$0xff] %v1696
        %1807 = vst [vmem:[%s217 + $0x68] sm:$0xff] %v1701
        %1808 = vst [vmem:[%s217 + $0x70] sm:$0xff] %v1706
        %1809 = vst [vmem:[%s217 + $0x78] sm:$0xff] %v1711
        %1810 = vst [vmem:[%s217 + $0x80] sm:$0xff] %v1716
        %1811 = vst [vmem:[%s217 + $0x88] sm:$0xff] %v1721
        %1812 = vst [vmem:[%s217 + $0x90] sm:$0xff] %v1726
        %1813 = vst [vmem:[%s217 + $0x98] sm:$0xff] %v1731
        %1814 = vst [vmem:[%s217 + $0xa0] sm:$0xff] %v1736
        %1815 = vst [vmem:[%s217 + $0xa8] sm:$0xff] %v1741
        %1816 = vst [vmem:[%s217 + $0xb0] sm:$0xff] %v1746
        %1817 = vst [vmem:[%s217 + $0xb8] sm:$0xff] %v1751
        %1818 = vst [vmem:[%s217 + $0xc0] sm:$0xff] %v1756
        %1819 = vst [vmem:[%s217 + $0xc8] sm:$0xff] %v1761
        %1820 = vst [vmem:[%s217 + $0xd0] sm:$0xff] %v1766
        %1821 = vst [vmem:[%s217 + $0xd8] sm:$0xff] %v1771
        %1822 = vst [vmem:[%s217 + $0xe0] sm:$0xff] %v1776
        %1823 = vst [vmem:[%s217 + $0xe8] sm:$0xff] %v1781
        %1824 = vst [vmem:[%s217 + $0xf0] sm:$0xff] %v1786
        %1825 = vst [vmem:[%s217 + $0xf8] sm:$0xff] %v1791
        %s1826 = sand.u32 %s97, 1
        %s1827 = scalar_lea.sflag [#allocation4], %s1826
        %s1828 = sand.u32 %s97, 1
        %s1829 = smul.addr %s1828, 256
        %s1830 = scalar_lea.vmem [#allocation8], %s1829
        // Predicated region
        $region45: #{tpu_custom_call.1} parent=31 // pred_check
          %p1831 = pneg %p107
        $region46: #{tpu_custom_call.1} parent=31 // pred_check_branch
          %1833 = sbr.rel (%p1831) target = $region48
        $region47: #{tpu_custom_call.1} parent=31 // pred_region
          %s1834 = smul.u32 32, %s21
          %s1836 = ssub.s32 4096, 4096
          %1837 = vsyncadd %s1827, %s1836
          %s1838 = smul.addr %s1834, 128
          %s1839 = scalar_lea.hbm %s3, %s1838
          %s1840 = sshll.u32 %s1830, 4
          %s1841 = int_to_ptr.vmem [resolvable:$true] %s1840
          %1846 = dma.vmem_to_hbm [thread:$0]  %s1841, 4096, %s1839, %s1827, 128, 128, 8
        $region48: #{tpu_custom_call.1} parent=31 // pred_fallthru
          _
      $region32: #{tpu_custom_call.1} parent=5 // pred_fallthru
        _
      %p1847 = scmp.le.s32.totalorder 2, %s16
      // Predicated region
      $region49: #{tpu_custom_call.1} parent=5 // pred_check
        %p1848 = pneg %p1847
      $region50: #{tpu_custom_call.1} parent=5 // pred_check_branch
        %1850 = sbr.rel (%p1848) target = $region52
      $region51: #{tpu_custom_call.1} parent=5 // pred_region
        %s1851 = ssub.s32 %s16, 2
        // Predicated region
        $region53: #{tpu_custom_call.1} parent=51 // pred_check
          %p1852 = pneg %p113
        $region54: #{tpu_custom_call.1} parent=51 // pred_check_branch
          %1854 = sbr.rel (%p1852) target = $region56
        $region55: #{tpu_custom_call.1} parent=51 // pred_region
          %s1855 = sand.u32 %s98, 1
          %s1856 = scalar_lea.sflag [#allocation4], %s1855
          %s1857 = sand.u32 %s98, 1
          %s1858 = smul.addr %s1857, 256
          %s1859 = scalar_lea.vmem [#allocation8], %s1858
          %1860 = dma.done %s1856, 4096
        $region56: #{tpu_custom_call.1} parent=51 // pred_fallthru
          _
      $region52: #{tpu_custom_call.1} parent=5 // pred_fallthru
        _
    $region6: #{tpu_custom_call.1} parent=1 // loop_footer
      %s20 = sadd.s32 1, %s16
    $region7: #{tpu_custom_call.1} parent=1 // loop_footer_branch
      %15 = sbr.rel target = $region3
    $region8: #{tpu_custom_call.1} parent=1 // loop_exit
      _
    %1861 = vsyncpa [#allocation3], 1
    %s1862 = scalar_lea.sflag [#allocation3], 1
    %1863 = vsyncpa %s1862, 1
    %1864 = vsyncpa [#allocation6], 1
    %1865 = vsyncpa [#allocation4], 1
    %s1866 = scalar_lea.sflag [#allocation4], 1
    %1867 = vsyncpa %s1866, 1

</llo_original>
